<compile_context>
chip_gen: v6e
topology: v6e:2x2x1
jax: 0.10.0
libtpu: 0.0.40
codegen_flags: <defaults>
</compile_context>

<pallas_src>
import functools

import jax
import jax.numpy as jnp
from jax import lax
from jax.experimental import pallas as pl
from jax.experimental.pallas import tpu as pltpu


def _bfn_kernel(
    # ---- inputs ----
    tok_ref,      # (TBS, 1) int32              token ids, flattened rows
    t_ref,        # (TBS, 1) f32                per-row time (pre-expanded host-side)
    eps_ref,      # (TBS, K) f32                standard-normal flow noise (host-drawn)
    cemb_ref,     # (TB, Hp) f32                precomputed cond @ wc, zero-padded to Hp
    w1_ref,       # (K, Hp)  bf16               [w1 | wc1]   fused first layer
    b1_ref,       # (1, Hp)  f32                [b1 | bc1]
    wt_ref,       # (1, Hp)  f32                [wt |  0 ]   time embedding
    w2_ref,       # (Hp, K)  bf16               [[w2],[0]]   main head
    b2_ref,       # (1, K)   f32
    wc2_ref,      # (Hp, Dc) bf16               [[0],[wc2]]  classifier head
    bc2_ref,      # (1, Dc)  f32
    # ---- outputs ----
    outcat_ref,   # (TBS, 2K) f32               [output_params | theta] single lane-dense slab
    loss_ref,     # (1, 1, 128) f32             per-block SUM of the per-token cts-time loss
    pred_ref,     # (TB, Dc)  f32               classifier prediction pred_sv
    *, TB, S, K, beta1,
):
    TBS = TB * S
    fK = float(K)
    f32 = jnp.float32
    bf16 = jnp.bfloat16

    # ---- one-hot of token ids (exact int32 compare) ----
    tok = tok_ref[...]                                              # (TBS, 1) int32
    class_iota = lax.broadcasted_iota(jnp.int32, (TBS, K), 1)
    one_hot = (tok == class_iota).astype(f32)                       # (TBS, K)

    t_flat = t_ref[...]                                             # (TBS, 1) f32

    # ---- discrete Bayesian flow (noise provided host-side, f32 VPU/EUP math) ----
    beta = beta1 * t_flat * t_flat                                  # (TBS, 1)
    flow_logits = beta * (fK * one_hot - 1.0) + jnp.sqrt(beta * fK) * eps_ref[...]
    fl = flow_logits - jnp.max(flow_logits, axis=-1, keepdims=True)
    efl = jnp.exp(fl)
    theta = efl / jnp.sum(efl, axis=-1, keepdims=True)              # exact softmax

    # ---- fused first layer: main net + classifier net share one bf16 matmul ----
    net_in = 2.0 * theta - 1.0                                      # params_to_net_inputs
    h = jnp.dot(net_in.astype(bf16), w1_ref[...],
                preferred_element_type=f32)                         # (TBS, Hp) MXU, f32 acc
    h = h + b1_ref[...] + t_flat * wt_ref[...]
    # Per-sample condition embedding added row-wise via a 3-D broadcast (no selection matmul).
    Hp = h.shape[-1]
    h3 = h.reshape(TB, S, Hp) + cemb_ref[...][:, None, :]
    hcat3 = jnp.maximum(h3, 0.0)                                    # (TB, S, Hp)
    hcat = hcat3.reshape(TBS, Hp)

    # ---- main head + continuous-time discrete KL loss (reduced to one scalar) ----
    out_logits = jnp.dot(hcat.astype(bf16), w2_ref[...],
                         preferred_element_type=f32) + b2_ref[...]  # (TBS, K)
    ol = out_logits - jnp.max(out_logits, axis=-1, keepdims=True)
    eol = jnp.exp(ol)
    probs = eol / jnp.sum(eol, axis=-1, keepdims=True)
    sq = (one_hot - probs) ** 2
    loss_rows = (fK * beta1) * t_flat * jnp.sum(sq, axis=-1, keepdims=True)   # (TBS, 1)
    loss_ref[...] = jnp.broadcast_to(jnp.sum(loss_rows), (1, 1, 128))

    # ---- single output store: [output_params | theta] ----
    outcat_ref[...] = jnp.concatenate([out_logits, theta], axis=-1)

    # ---- classifier head: mean-pool tokens per sample via reshape-sum (no P matmul) ----
    pooled = jnp.sum(hcat3, axis=1) * (1.0 / S)                     # (TB, Hp)
    pred_ref[...] = (jnp.dot(pooled.astype(bf16), wc2_ref[...],
                             preferred_element_type=f32) + bc2_ref[...])      # (TB, Dc)


def _block_vmem_bytes(tb, S, K, Hp, Dc):
    """Rough per-grid-step VMEM footprint: live f32 intermediates + double-buffered I/O."""
    tbs = tb * S
    intermediates = 10 * tbs * max(K, Hp) * 4     # one_hot/flow/theta/net_in/h/out/probs/...
    io_streams = 2 * (tbs * (K * 4 + 2 * K * 4 + 8) + tb * (Hp + Dc) * 4 + 512)
    weights = (K * Hp + Hp * K + Hp * Dc) * 2 + (3 * Hp + K + Dc) * 4
    return intermediates + io_streams + weights


def _auto_block_batch(B, S, K, Hp, Dc, vmem_budget_bytes=20 << 20):
    """Largest batch-block whose footprint fits the budget; prefer an even number of
    grid blocks (v7x has two TensorCores) once a block already has >= 512 rows."""
    valid = [d for d in range(1, B + 1) if B % d == 0 and (d % 8 == 0 or d == B)]
    fitting = [d for d in valid if _block_vmem_bytes(d, S, K, Hp, Dc) <= vmem_budget_bytes]
    if not fitting:
        fitting = valid[:1]
    tb = fitting[-1]
    for d in reversed(fitting):
        nb = B // d
        if nb >= 2 and nb % 2 == 0 and (d * S >= 512 or 2 * d >= B):
            tb = d
            break
    return tb


def bfn_forward(cad_vec, conditions, t_batch, eps, params, *, beta1=3.0,
                block_batch=None, vmem_limit_bytes=None):
    """Returns (loss_mean, mse_loss, output_params, theta) matching BFN.forward semantics
    (loss.mean() is what PyTorch returns; mse_loss is computed en route)."""
    B, S = cad_vec.shape
    K, H = params["w1"].shape
    Hc = params["wc1"].shape[1]
    Dc = conditions.shape[-1]
    Hp = H + Hc
    f32, bf16 = jnp.float32, jnp.bfloat16
    hi = lax.Precision.HIGHEST

    if block_batch is None:
        block_batch = _auto_block_batch(B, S, K, Hp, Dc)
    TB = block_batch
    assert B % TB == 0, "batch must be divisible by block_batch"
    num_blocks = B // TB
    TBS = TB * S

    if vmem_limit_bytes is None:
        # Above scoped defaults (16 MiB v5e / 32 MiB v6e,v7x) but below v7x's 64 MiB physical.
        est = _block_vmem_bytes(TB, S, K, Hp, Dc)
        vmem_limit_bytes = int(min(max(2 * est, 32 << 20), 48 << 20))

    # Host-side weight packing: fuse first layers and zero-pad per-branch terms so the
    # kernel never slices inside a lane tile. Matmul operands bf16; elementwise terms f32.
    w1cat = jnp.concatenate([params["w1"], params["wc1"]], axis=1).astype(bf16)   # (K, Hp)
    b1cat = jnp.concatenate([params["b1"], params["bc1"]], axis=1).astype(f32)    # (1, Hp)
    wtcat = jnp.concatenate([params["wt"].astype(f32), jnp.zeros((1, Hc), f32)], axis=1)
    w2pad = jnp.concatenate([params["w2"],
                             jnp.zeros((Hc, K), params["w2"].dtype)], axis=0).astype(bf16)
    wc2pad = jnp.concatenate([jnp.zeros((H, Dc), params["wc2"].dtype),
                              params["wc2"]], axis=0).astype(bf16)

    cond_f32 = conditions.astype(f32)
    # Hoist the tiny (B,Dc)x(Dc,H) condition matmul out of the kernel.
    cond_emb = jnp.concatenate(
        [jnp.dot(cond_f32, params["wc"].astype(f32), precision=hi),
         jnp.zeros((B, Hc), f32)], axis=1)                                        # (B, Hp)

    tok2 = cad_vec.astype(jnp.int32).reshape(B * S, 1)
    t_rows = jnp.repeat(t_batch.astype(f32), S).reshape(B * S, 1)                 # per-row t
    eps2 = eps.astype(f32).reshape(B * S, K)

    kernel = functools.partial(_bfn_kernel, TB=TB, S=S, K=K, beta1=beta1)
    full = lambda shape: pl.BlockSpec(shape, lambda b: (0,) * len(shape))

    outcat, loss_blk, pred_sv = pl.pallas_call(
        kernel,
        grid=(num_blocks,),
        in_specs=[
            pl.BlockSpec((TBS, 1), lambda b: (b, 0)),                # tokens
            pl.BlockSpec((TBS, 1), lambda b: (b, 0)),                # per-row t
            pl.BlockSpec((TBS, K), lambda b: (b, 0)),                # flow noise eps
            pl.BlockSpec((TB, Hp), lambda b: (b, 0)),                # cond embedding
            full((K, Hp)), full((1, Hp)), full((1, Hp)),             # w1cat, b1cat, wtcat
            full((Hp, K)), full((1, K)),                             # w2pad, b2
            full((Hp, Dc)), full((1, Dc)),                           # wc2pad, bc2
        ],
        out_specs=[
            pl.BlockSpec((TBS, 2 * K), lambda b: (b, 0)),            # [out | theta]
            pl.BlockSpec((1, 1, 128), lambda b: (b, 0, 0)),          # per-block loss sum
            pl.BlockSpec((TB, Dc), lambda b: (b, 0)),                # pred_sv
        ],
        out_shape=[
            jax.ShapeDtypeStruct((B * S, 2 * K), f32),
            jax.ShapeDtypeStruct((num_blocks, 1, 128), f32),
            jax.ShapeDtypeStruct((B, Dc), f32),
        ],
        compiler_params=pltpu.CompilerParams(
            dimension_semantics=("parallel",),                       # batch blocks independent
            vmem_limit_bytes=vmem_limit_bytes),
    )(
        tok2, t_rows, eps2, cond_emb,
        w1cat, b1cat, wtcat, w2pad, params["b2"].astype(f32),
        wc2pad, params["bc2"].astype(f32),
    )

    out_params = outcat[:, :K].reshape(B, S, K)
    theta = outcat[:, K:].reshape(B, S, K)
    loss_mean = jnp.sum(loss_blk[:, 0, 0]) / (B * S)                 # == loss.mean()
    mse_loss = jnp.mean((cond_f32 - pred_sv) ** 2)                   # nn.MSELoss
    return loss_mean, mse_loss, out_params, theta


def sample_t(key, B, n_steps=None):
    """Mirrors BFN.sample_t: one t per batch sample (broadcast over tokens host-side)."""
    if n_steps is None or n_steps == 0:
        return jax.random.uniform(key, (B,), dtype=jnp.float32)
    return jax.random.randint(key, (B,), 0, n_steps).astype(jnp.float32) / n_steps


def init_params(key, K, H, Hc, Dc):
    ks = jax.random.split(key, 6)
    s = lambda n: 1.0 / jnp.sqrt(jnp.float32(n))
    return {
        "w1": jax.random.normal(ks[0], (K, H), jnp.float32) * s(K),
        "b1": jnp.zeros((1, H), jnp.float32),
        "wt": jax.random.normal(ks[1], (1, H), jnp.float32),
        "wc": jax.random.normal(ks[2], (Dc, H), jnp.float32) * s(Dc),
        "w2": jax.random.normal(ks[3], (H, K), jnp.float32) * s(H),
        "b2": jnp.zeros((1, K), jnp.float32),
        "wc1": jax.random.normal(ks[4], (K, Hc), jnp.float32) * s(K),
        "bc1": jnp.zeros((1, Hc), jnp.float32),
        "wc2": jax.random.normal(ks[5], (Hc, Dc), jnp.float32) * s(Hc),
        "bc2": jnp.zeros((1, Dc), jnp.float32),
    }


# TODO(synk): BFN.sample / average_theta_guided (torch.distributions MC sampling loops),
# discrete_time_loss and reconstruction_loss are inference/MC utilities outside the
# training forward hot path and are not implemented here.

if __name__ == "__main__":
    B, S, K, H, Hc, Dc = 32, 8, 32, 32, 16, 8
    beta1 = 3.0
    f32, bf16 = jnp.float32, jnp.bfloat16
    hi = lax.Precision.HIGHEST

    key = jax.random.PRNGKey(0)
    k_tok, k_cond, k_t, k_eps, k_par = jax.random.split(key, 5)

    cad_vec = jax.random.randint(k_tok, (B, S), 0, K, dtype=jnp.int32)
    conditions = jax.random.normal(k_cond, (B, Dc), f32)
    t_batch = sample_t(k_t, B, n_steps=None)                         # (B,)
    eps = jax.random.normal(k_eps, (B, S, K), f32)                   # flow noise (host-drawn)
    params = init_params(k_par, K, H, Hc, Dc)

    fwd = jax.jit(functools.partial(bfn_forward, beta1=beta1))
    loss_mean, mse_loss, out_params, theta = fwd(cad_vec, conditions, t_batch, eps, params)
    jax.block_until_ready((loss_mean, mse_loss, out_params, theta))

    assert out_params.shape == (B, S, K) and theta.shape == (B, S, K)
    assert bool(jnp.isfinite(loss_mean)) and bool(jnp.isfinite(mse_loss))
    # theta rows are probability vectors (exact softmax division in-kernel)
    assert bool(jnp.allclose(jnp.sum(theta, axis=-1), 1.0, atol=1e-4))

    # Pure-JAX reference mirroring the kernel math (bf16 matmul operands, f32 accumulation).
    tb3 = t_batch[:, None, None]
    one_hot = jax.nn.one_hot(cad_vec, K, dtype=f32)
    beta = beta1 * tb3 * tb3
    ref_theta = jax.nn.softmax(beta * (K * one_hot - 1.0) + jnp.sqrt(beta * K) * eps, axis=-1)
    net_in = 2.0 * ref_theta - 1.0
    cond_h = jnp.dot(conditions, params["wc"], precision=hi)[:, None, :]
    ref_h = jnp.maximum(
        jnp.einsum("bsk,kh->bsh", net_in.astype(bf16), params["w1"].astype(bf16),
                   preferred_element_type=f32)
        + params["b1"] + tb3 * params["wt"] + cond_h, 0.0)
    ref_out = jnp.einsum("bsh,hk->bsk", ref_h.astype(bf16), params["w2"].astype(bf16),
                         preferred_element_type=f32) + params["b2"]
    ref_probs = jax.nn.softmax(ref_out, axis=-1)
    ref_loss = K * beta1 * t_batch[:, None] * jnp.sum((one_hot - ref_probs) ** 2, axis=-1)
    ref_hc = jnp.maximum(
        jnp.einsum("bsk,kh->bsh", net_in.astype(bf16), params["wc1"].astype(bf16),
                   preferred_element_type=f32) + params["bc1"], 0.0)
    ref_pred = jnp.dot(jnp.mean(ref_hc, axis=1).astype(bf16), params["wc2"].astype(bf16),
                       preferred_element_type=f32) + params["bc2"]

    assert bool(jnp.allclose(theta, ref_theta, atol=1e-3))
    assert bool(jnp.allclose(out_params, ref_out, atol=5e-3, rtol=5e-3))
    assert bool(jnp.allclose(loss_mean, jnp.mean(ref_loss), rtol=2e-2, atol=1e-3))
    assert bool(jnp.allclose(mse_loss, jnp.mean((conditions - ref_pred) ** 2),
                             rtol=2e-2, atol=1e-3))

    print("KERNEL_OK")
</pallas_src>

<mosaic_0001>
module attributes {stable_mosaic.version = 11 : i64} {
  func.func @_bfn_kernel(%arg0: i32, %arg1: memref<128x1xi32, #tpu.memory_space<vmem>>, %arg2: memref<128x1xf32, #tpu.memory_space<vmem>>, %arg3: memref<128x32xf32, #tpu.memory_space<vmem>>, %arg4: memref<16x48xf32, #tpu.memory_space<vmem>>, %arg5: memref<32x48xbf16, #tpu.memory_space<vmem>>, %arg6: memref<1x48xf32, #tpu.memory_space<vmem>>, %arg7: memref<1x48xf32, #tpu.memory_space<vmem>>, %arg8: memref<48x32xbf16, #tpu.memory_space<vmem>>, %arg9: memref<1x32xf32, #tpu.memory_space<vmem>>, %arg10: memref<48x8xbf16, #tpu.memory_space<vmem>>, %arg11: memref<1x8xf32, #tpu.memory_space<vmem>>, %arg12: memref<128x64xf32, #tpu.memory_space<vmem>>, %arg13: memref<1x1x128xf32, #tpu.memory_space<vmem>>, %arg14: memref<16x8xf32, #tpu.memory_space<vmem>>) attributes {dimension_semantics = [#tpu.dimension_semantics<parallel>], iteration_bounds = array<i64: 2>, scalar_prefetch = 0 : i64, scratch_operands = 0 : i64, tpu.core_type = #tpu.core_type<tc>, window_params = [{transform_indices = @transform_0, window_bounds = array<i64: 128, 1>}, {transform_indices = @transform_1, window_bounds = array<i64: 128, 1>}, {transform_indices = @transform_2, window_bounds = array<i64: 128, 32>}, {transform_indices = @transform_3, window_bounds = array<i64: 16, 48>}, {pipeline_mode = #tpu.pipeline_mode<synchronous>, transform_indices = @transform_4, window_bounds = array<i64: 32, 48>}, {pipeline_mode = #tpu.pipeline_mode<synchronous>, transform_indices = @transform_5, window_bounds = array<i64: 1, 48>}, {pipeline_mode = #tpu.pipeline_mode<synchronous>, transform_indices = @transform_6, window_bounds = array<i64: 1, 48>}, {pipeline_mode = #tpu.pipeline_mode<synchronous>, transform_indices = @transform_7, window_bounds = array<i64: 48, 32>}, {pipeline_mode = #tpu.pipeline_mode<synchronous>, transform_indices = @transform_8, window_bounds = array<i64: 1, 32>}, {pipeline_mode = #tpu.pipeline_mode<synchronous>, transform_indices = @transform_9, window_bounds = array<i64: 48, 8>}, {pipeline_mode = #tpu.pipeline_mode<synchronous>, transform_indices = @transform_10, window_bounds = array<i64: 1, 8>}, {transform_indices = @transform_11, window_bounds = array<i64: 128, 64>}, {transform_indices = @transform_12, window_bounds = array<i64: 1, 1, 128>}, {transform_indices = @transform_13, window_bounds = array<i64: 16, 8>}]} {
    %c0 = arith.constant 0 : index
    %c0_0 = arith.constant 0 : index
    %0 = vector.load %arg1[%c0, %c0_0] : memref<128x1xi32, #tpu.memory_space<vmem>>, vector<128x1xi32>
    %1 = tpu.iota {dimensions = array<i32: 1>} : vector<128x32xi32>
    %2 = vector.broadcast %0 : vector<128x1xi32> to vector<128x32xi32>
    %3 = arith.cmpi eq, %2, %1 : vector<128x32xi32>
    %4 = arith.extui %3 : vector<128x32xi1> to vector<128x32xi32>
    %5 = arith.sitofp %4 : vector<128x32xi32> to vector<128x32xf32>
    %c0_1 = arith.constant 0 : index
    %c0_2 = arith.constant 0 : index
    %6 = vector.load %arg2[%c0_1, %c0_2] : memref<128x1xf32, #tpu.memory_space<vmem>>, vector<128x1xf32>
    %cst = arith.constant 3.000000e+00 : f32
    %7 = vector.broadcast %cst : f32 to vector<128x1xf32>
    %8 = arith.mulf %7, %6 : vector<128x1xf32>
    %9 = arith.mulf %8, %6 : vector<128x1xf32>
    %cst_3 = arith.constant 3.200000e+01 : f32
    %10 = vector.broadcast %cst_3 : f32 to vector<128x32xf32>
    %11 = arith.mulf %10, %5 : vector<128x32xf32>
    %cst_4 = arith.constant 1.000000e+00 : f32
    %12 = vector.broadcast %cst_4 : f32 to vector<128x32xf32>
    %13 = arith.subf %11, %12 : vector<128x32xf32>
    %14 = vector.broadcast %9 : vector<128x1xf32> to vector<128x32xf32>
    %15 = arith.mulf %14, %13 : vector<128x32xf32>
    %cst_5 = arith.constant 3.200000e+01 : f32
    %16 = vector.broadcast %cst_5 : f32 to vector<128x1xf32>
    %17 = arith.mulf %9, %16 : vector<128x1xf32>
    %18 = math.sqrt %17 : vector<128x1xf32>
    %c0_6 = arith.constant 0 : index
    %c0_7 = arith.constant 0 : index
    %19 = vector.load %arg3[%c0_6, %c0_7] : memref<128x32xf32, #tpu.memory_space<vmem>>, vector<128x32xf32>
    %20 = vector.broadcast %18 : vector<128x1xf32> to vector<128x32xf32>
    %21 = arith.mulf %20, %19 : vector<128x32xf32>
    %22 = arith.addf %15, %21 : vector<128x32xf32>
    %cst_8 = arith.constant dense<0xFF800000> : vector<128xf32>
    %23 = vector.multi_reduction <maximumf>, %22, %cst_8 [1] : vector<128x32xf32> to vector<128xf32>
    %24 = vector.shape_cast %23 : vector<128xf32> to vector<128x1xf32>
    %25 = vector.broadcast %24 : vector<128x1xf32> to vector<128x32xf32>
    %26 = arith.subf %22, %25 : vector<128x32xf32>
    %27 = math.exp %26 : vector<128x32xf32>
    %cst_9 = arith.constant dense<0.000000e+00> : vector<128xf32>
    %28 = vector.multi_reduction <add>, %27, %cst_9 [1] : vector<128x32xf32> to vector<128xf32>
    %29 = vector.shape_cast %28 : vector<128xf32> to vector<128x1xf32>
    %30 = vector.broadcast %29 : vector<128x1xf32> to vector<128x32xf32>
    %31 = arith.divf %27, %30 : vector<128x32xf32>
    %cst_10 = arith.constant 2.000000e+00 : f32
    %32 = vector.broadcast %cst_10 : f32 to vector<128x32xf32>
    %33 = arith.mulf %32, %31 : vector<128x32xf32>
    %cst_11 = arith.constant 1.000000e+00 : f32
    %34 = vector.broadcast %cst_11 : f32 to vector<128x32xf32>
    %35 = arith.subf %33, %34 : vector<128x32xf32>
    %36 = arith.truncf %35 : vector<128x32xf32> to vector<128x32xbf16>
    %c0_12 = arith.constant 0 : index
    %c0_13 = arith.constant 0 : index
    %37 = vector.load %arg5[%c0_12, %c0_13] : memref<32x48xbf16, #tpu.memory_space<vmem>>, vector<32x48xbf16>
    %cst_14 = arith.constant dense<0.000000e+00> : vector<128x48xf32>
    %38 = tpu.matmul %36, %37, %cst_14 {dimension_numbers = #tpu.dot_dimension_numbers<[1], [0], [0], [1], [0, 0, 1, 1], [], []>} : vector<128x32xbf16>, vector<32x48xbf16>, vector<128x48xf32> -> vector<128x48xf32>
    %c0_15 = arith.constant 0 : index
    %c0_16 = arith.constant 0 : index
    %39 = vector.load %arg6[%c0_15, %c0_16] : memref<1x48xf32, #tpu.memory_space<vmem>>, vector<1x48xf32>
    %40 = vector.broadcast %39 : vector<1x48xf32> to vector<128x48xf32>
    %41 = arith.addf %38, %40 : vector<128x48xf32>
    %c0_17 = arith.constant 0 : index
    %c0_18 = arith.constant 0 : index
    %42 = vector.load %arg7[%c0_17, %c0_18] : memref<1x48xf32, #tpu.memory_space<vmem>>, vector<1x48xf32>
    %43 = vector.broadcast %6 : vector<128x1xf32> to vector<128x48xf32>
    %44 = vector.broadcast %42 : vector<1x48xf32> to vector<128x48xf32>
    %45 = arith.mulf %43, %44 : vector<128x48xf32>
    %46 = arith.addf %41, %45 : vector<128x48xf32>
    %47 = vector.shape_cast %46 : vector<128x48xf32> to vector<16x8x48xf32>
    %c0_19 = arith.constant 0 : index
    %c0_20 = arith.constant 0 : index
    %48 = vector.load %arg4[%c0_19, %c0_20] : memref<16x48xf32, #tpu.memory_space<vmem>>, vector<16x48xf32>
    %49 = vector.shape_cast %48 : vector<16x48xf32> to vector<16x1x48xf32>
    %50 = vector.broadcast %49 : vector<16x1x48xf32> to vector<16x8x48xf32>
    %51 = arith.addf %47, %50 : vector<16x8x48xf32>
    %cst_21 = arith.constant 0.000000e+00 : f32
    %52 = vector.broadcast %cst_21 : f32 to vector<16x8x48xf32>
    %53 = arith.maximumf %51, %52 : vector<16x8x48xf32>
    %54 = vector.shape_cast %53 : vector<16x8x48xf32> to vector<128x48xf32>
    %55 = arith.truncf %54 : vector<128x48xf32> to vector<128x48xbf16>
    %c0_22 = arith.constant 0 : index
    %c0_23 = arith.constant 0 : index
    %56 = vector.load %arg8[%c0_22, %c0_23] : memref<48x32xbf16, #tpu.memory_space<vmem>>, vector<48x32xbf16>
    %cst_24 = arith.constant dense<0.000000e+00> : vector<128x32xf32>
    %57 = tpu.matmul %55, %56, %cst_24 {dimension_numbers = #tpu.dot_dimension_numbers<[1], [0], [0], [1], [0, 0, 1, 1], [], []>} : vector<128x48xbf16>, vector<48x32xbf16>, vector<128x32xf32> -> vector<128x32xf32>
    %c0_25 = arith.constant 0 : index
    %c0_26 = arith.constant 0 : index
    %58 = vector.load %arg9[%c0_25, %c0_26] : memref<1x32xf32, #tpu.memory_space<vmem>>, vector<1x32xf32>
    %59 = vector.broadcast %58 : vector<1x32xf32> to vector<128x32xf32>
    %60 = arith.addf %57, %59 : vector<128x32xf32>
    %cst_27 = arith.constant dense<0xFF800000> : vector<128xf32>
    %61 = vector.multi_reduction <maximumf>, %60, %cst_27 [1] : vector<128x32xf32> to vector<128xf32>
    %62 = vector.shape_cast %61 : vector<128xf32> to vector<128x1xf32>
    %63 = vector.broadcast %62 : vector<128x1xf32> to vector<128x32xf32>
    %64 = arith.subf %60, %63 : vector<128x32xf32>
    %65 = math.exp %64 : vector<128x32xf32>
    %cst_28 = arith.constant dense<0.000000e+00> : vector<128xf32>
    %66 = vector.multi_reduction <add>, %65, %cst_28 [1] : vector<128x32xf32> to vector<128xf32>
    %67 = vector.shape_cast %66 : vector<128xf32> to vector<128x1xf32>
    %68 = vector.broadcast %67 : vector<128x1xf32> to vector<128x32xf32>
    %69 = arith.divf %65, %68 : vector<128x32xf32>
    %70 = arith.subf %5, %69 : vector<128x32xf32>
    %71 = arith.mulf %70, %70 : vector<128x32xf32>
    %cst_29 = arith.constant 9.600000e+01 : f32
    %72 = vector.broadcast %cst_29 : f32 to vector<128x1xf32>
    %73 = arith.mulf %72, %6 : vector<128x1xf32>
    %cst_30 = arith.constant dense<0.000000e+00> : vector<128xf32>
    %74 = vector.multi_reduction <add>, %71, %cst_30 [1] : vector<128x32xf32> to vector<128xf32>
    %75 = vector.shape_cast %74 : vector<128xf32> to vector<128x1xf32>
    %76 = arith.mulf %73, %75 : vector<128x1xf32>
    %77 = vector.shape_cast %76 : vector<128x1xf32> to vector<1x128x1xf32>
    %cst_31 = arith.constant dense<0.000000e+00> : vector<1xf32>
    %78 = vector.multi_reduction <add>, %77, %cst_31 [1, 2] : vector<1x128x1xf32> to vector<1xf32>
    %79 = vector.shape_cast %78 : vector<1xf32> to vector<1x1x1xf32>
    %80 = vector.extract %79[0, 0, 0] : f32 from vector<1x1x1xf32>
    %81 = vector.broadcast %80 : f32 to vector<1x1x128xf32>
    %c0_32 = arith.constant 0 : index
    %c0_33 = arith.constant 0 : index
    %c0_34 = arith.constant 0 : index
    %82 = vector.load %arg13[%c0_32, %c0_33, %c0_34] : memref<1x1x128xf32, #tpu.memory_space<vmem>>, vector<1x1x128xf32>
    tpu.vector_store %arg13[%c0_32, %c0_33, %c0_34], %81 {strides = array<i32>} : memref<1x1x128xf32, #tpu.memory_space<vmem>>, vector<1x1x128xf32>,
    %83 = tpu.concatenate %60, %31 in 1 : vector<128x32xf32>, vector<128x32xf32> -> vector<128x64xf32>
    %c0_35 = arith.constant 0 : index
    %c0_36 = arith.constant 0 : index
    %84 = vector.load %arg12[%c0_35, %c0_36] : memref<128x64xf32, #tpu.memory_space<vmem>>, vector<128x64xf32>
    tpu.vector_store %arg12[%c0_35, %c0_36], %83 {strides = array<i32>} : memref<128x64xf32, #tpu.memory_space<vmem>>, vector<128x64xf32>,
    %cst_37 = arith.constant dense<0.000000e+00> : vector<16x48xf32>
    %85 = vector.multi_reduction <add>, %53, %cst_37 [1] : vector<16x8x48xf32> to vector<16x48xf32>
    %cst_38 = arith.constant 1.250000e-01 : f32
    %86 = vector.broadcast %cst_38 : f32 to vector<16x48xf32>
    %87 = arith.mulf %85, %86 : vector<16x48xf32>
    %88 = arith.truncf %87 : vector<16x48xf32> to vector<16x48xbf16>
    %c0_39 = arith.constant 0 : index
    %c0_40 = arith.constant 0 : index
    %89 = vector.load %arg10[%c0_39, %c0_40] : memref<48x8xbf16, #tpu.memory_space<vmem>>, vector<48x8xbf16>
    %cst_41 = arith.constant dense<0.000000e+00> : vector<16x8xf32>
    %90 = tpu.matmul %88, %89, %cst_41 {dimension_numbers = #tpu.dot_dimension_numbers<[1], [0], [0], [1], [0, 0, 1, 1], [], []>} : vector<16x48xbf16>, vector<48x8xbf16>, vector<16x8xf32> -> vector<16x8xf32>
    %c0_42 = arith.constant 0 : index
    %c0_43 = arith.constant 0 : index
    %91 = vector.load %arg11[%c0_42, %c0_43] : memref<1x8xf32, #tpu.memory_space<vmem>>, vector<1x8xf32>
    %92 = vector.broadcast %91 : vector<1x8xf32> to vector<16x8xf32>
    %93 = arith.addf %90, %92 : vector<16x8xf32>
    %c0_44 = arith.constant 0 : index
    %c0_45 = arith.constant 0 : index
    %94 = vector.load %arg14[%c0_44, %c0_45] : memref<16x8xf32, #tpu.memory_space<vmem>>, vector<16x8xf32>
    tpu.vector_store %arg14[%c0_44, %c0_45], %93 {strides = array<i32>} : memref<16x8xf32, #tpu.memory_space<vmem>>, vector<16x8xf32>,
    return
  }
  func.func @transform_0(%arg0: i32) -> (i32, i32) {
    %c0_i32 = arith.constant 0 : i32
    %c0_i32_0 = arith.constant 0 : i32
    return %arg0, %c0_i32 : i32, i32
  }
  func.func @transform_1(%arg0: i32) -> (i32, i32) {
    %c0_i32 = arith.constant 0 : i32
    %c0_i32_0 = arith.constant 0 : i32
    return %arg0, %c0_i32 : i32, i32
  }
  func.func @transform_2(%arg0: i32) -> (i32, i32) {
    %c0_i32 = arith.constant 0 : i32
    %c0_i32_0 = arith.constant 0 : i32
    return %arg0, %c0_i32 : i32, i32
  }
  func.func @transform_3(%arg0: i32) -> (i32, i32) {
    %c0_i32 = arith.constant 0 : i32
    %c0_i32_0 = arith.constant 0 : i32
    return %arg0, %c0_i32 : i32, i32
  }
  func.func @transform_4(%arg0: i32) -> (i32, i32) {
    %c0_i32 = arith.constant 0 : i32
    %c0_i32_0 = arith.constant 0 : i32
    %c0_i32_1 = arith.constant 0 : i32
    return %c0_i32, %c0_i32_0 : i32, i32
  }
  func.func @transform_5(%arg0: i32) -> (i32, i32) {
    %c0_i32 = arith.constant 0 : i32
    %c0_i32_0 = arith.constant 0 : i32
    %c0_i32_1 = arith.constant 0 : i32
    return %c0_i32, %c0_i32_0 : i32, i32
  }
  func.func @transform_6(%arg0: i32) -> (i32, i32) {
    %c0_i32 = arith.constant 0 : i32
    %c0_i32_0 = arith.constant 0 : i32
    %c0_i32_1 = arith.constant 0 : i32
    return %c0_i32, %c0_i32_0 : i32, i32
  }
  func.func @transform_7(%arg0: i32) -> (i32, i32) {
    %c0_i32 = arith.constant 0 : i32
    %c0_i32_0 = arith.constant 0 : i32
    %c0_i32_1 = arith.constant 0 : i32
    return %c0_i32, %c0_i32_0 : i32, i32
  }
  func.func @transform_8(%arg0: i32) -> (i32, i32) {
    %c0_i32 = arith.constant 0 : i32
    %c0_i32_0 = arith.constant 0 : i32
    %c0_i32_1 = arith.constant 0 : i32
    return %c0_i32, %c0_i32_0 : i32, i32
  }
  func.func @transform_9(%arg0: i32) -> (i32, i32) {
    %c0_i32 = arith.constant 0 : i32
    %c0_i32_0 = arith.constant 0 : i32
    %c0_i32_1 = arith.constant 0 : i32
    return %c0_i32, %c0_i32_0 : i32, i32
  }
  func.func @transform_10(%arg0: i32) -> (i32, i32) {
    %c0_i32 = arith.constant 0 : i32
    %c0_i32_0 = arith.constant 0 : i32
    %c0_i32_1 = arith.constant 0 : i32
    return %c0_i32, %c0_i32_0 : i32, i32
  }
  func.func @transform_11(%arg0: i32) -> (i32, i32) {
    %c0_i32 = arith.constant 0 : i32
    %c0_i32_0 = arith.constant 0 : i32
    return %arg0, %c0_i32 : i32, i32
  }
  func.func @transform_12(%arg0: i32) -> (i32, i32, i32) {
    %c0_i32 = arith.constant 0 : i32
    %c0_i32_0 = arith.constant 0 : i32
    %c0_i32_1 = arith.constant 0 : i32
    return %arg0, %c0_i32, %c0_i32_0 : i32, i32, i32
  }
  func.func @transform_13(%arg0: i32) -> (i32, i32) {
    %c0_i32 = arith.constant 0 : i32
    %c0_i32_0 = arith.constant 0 : i32
    return %arg0, %c0_i32 : i32, i32
  }
}

</mosaic_0001>

<llo_original>
// kernel: bfn_forward.1
$region0: #{bfn_forward.1}
  #allocation0 [shape = 'u32[]', space=smem, size = 0x4, offset = 0x4, fixed_abs, tag = 'smem constant byte address 0x4 - core index']
  #allocation1 [shape = 'u32[144,128]{1,0:T(1,128)}', space=vmem, size = 0x12000, scoped, tag = 'internal scratch']
  %s0 = inlined_call_operand.vmem [shape: s32[256,1], index: 0, kind: input, shape index: {}]
  %s1 = inlined_call_operand.vmem [shape: f32[256,1], index: 1, kind: input, shape index: {}]
  %s2 = inlined_call_operand.vmem [shape: f32[256,32], index: 2, kind: input, shape index: {}]
  %s3 = inlined_call_operand.vmem [shape: f32[32,48], index: 3, kind: input, shape index: {}]
  %s4 = inlined_call_operand.vmem [shape: bf16[32,48], index: 4, kind: input, shape index: {}]
  %s5 = inlined_call_operand.vmem [shape: f32[1,48], index: 5, kind: input, shape index: {}]
  %s6 = inlined_call_operand.vmem [shape: f32[1,48], index: 6, kind: input, shape index: {}]
  %s7 = inlined_call_operand.vmem [shape: bf16[48,32], index: 7, kind: input, shape index: {}]
  %s8 = inlined_call_operand.vmem [shape: f32[1,32], index: 8, kind: input, shape index: {}]
  %s9 = inlined_call_operand.vmem [shape: bf16[48,8], index: 9, kind: input, shape index: {}]
  %s10 = inlined_call_operand.vmem [shape: f32[1,8], index: 10, kind: input, shape index: {}]
  %s11 = inlined_call_operand.vmem [shape: f32[256,64], index: 11, kind: output, shape index: {0}]
  %s12 = inlined_call_operand.vmem [shape: f32[2,1,128], index: 12, kind: output, shape index: {1}]
  %s13 = inlined_call_operand.vmem [shape: f32[32,8], index: 13, kind: output, shape index: {2}]
  %14 = xla_tuple %s11, %s12, %s13
  %s15 = sld [smem:[#allocation0]]
  $region93: #{bfn_forward.1} parent=0
    _
  %s17 = ssub.s32 1, %s15
  %s18 = scalar_select 0, %s17, %s15
  loop: start=0, step=1, limit=4
  $region2: #{bfn_forward.1} parent=0 // loop_pre_header
    _
  $region3: #{bfn_forward.1} parent=0 // loop_header
    %s20 = sphi 0, %s24
    %p21 = scmp.ge.s32.totalorder %s20, 4
    %s30 = sphi 0, %s32
    %s33 = sphi 0, %s30
    %s34 = sphi 0, %s33
    %s50 = sphi 0, %s34
    %s56 = sphi 0, %s58
    %s59 = sphi 0, %s56
    %s60 = sphi 0, %s59
    %s76 = sphi 0, %s60
    %s82 = sphi 0, %s84
    %s85 = sphi 0, %s82
    %s86 = sphi 0, %s85
    %s102 = sphi 0, %s86
    %s108 = sphi 0, %s110
    %s111 = sphi 0, %s108
    %s112 = sphi 0, %s111
    %s128 = sphi 0, %s112
    %s132 = sphi 0, %s132
    %s134 = sphi 0, %s132
    %s135 = sphi 0, %s134
    %s149 = sphi 0, %s135
    %s153 = sphi 0, %s153
    %s155 = sphi 0, %s153
    %s156 = sphi 0, %s155
    %s170 = sphi 0, %s156
    %s174 = sphi 0, %s174
    %s176 = sphi 0, %s174
    %s177 = sphi 0, %s176
    %s191 = sphi 0, %s177
    %s195 = sphi 0, %s195
    %s197 = sphi 0, %s195
    %s198 = sphi 0, %s197
    %s212 = sphi 0, %s198
    %s216 = sphi 0, %s216
    %s218 = sphi 0, %s216
    %s219 = sphi 0, %s218
    %s233 = sphi 0, %s219
    %s237 = sphi 0, %s237
    %s239 = sphi 0, %s237
    %s240 = sphi 0, %s239
    %s254 = sphi 0, %s240
    %s258 = sphi 0, %s258
    %s260 = sphi 0, %s258
    %s261 = sphi 0, %s260
    %s275 = sphi 0, %s261
    %s281 = sphi 0, %s283
    %s284 = sphi 0, %s281
    %s285 = sphi 0, %s284
    %s301 = sphi 0, %s285
    %s307 = sphi 0, %s309
    %s310 = sphi 0, %s307
    %s311 = sphi 0, %s310
    %s327 = sphi 0, %s311
    %s333 = sphi 0, %s335
    %s336 = sphi 0, %s333
    %s337 = sphi 0, %s336
    %s353 = sphi 0, %s337
  $region4: #{bfn_forward.1} parent=0 // loop_header_branch
    %23 = sbr.rel (%p21) target = $region8
  $region5: #{bfn_forward.1} parent=0 // loop_body
    %s25 = ssub.s32 %s20, 1
    %s26 = ssub.s32 %s20, 2
    %s27 = sadd.s32 %s20, 1
    %s28 = ssub.s32 %s20, %s27
    %p29 = scmp.eq.s32.totalorder %s28, 0
    %s31 = sadd.s32 %s30, 1
    %s32 = scalar_select %p29, %s30, %s31
    %p35 = pneg %p29
    %p36 = scmp.eq.s32.totalorder %s20, 1
    %p37 = por %p35, %p36
    %p38 = scmp.ne.s32.totalorder %s30, %s33
    %p39 = scmp.eq.s32.totalorder %s20, 0
    %p40 = por %p38, %p39
    %p41 = scmp.ne.s32.totalorder %s30, %s33
    %p42 = scmp.eq.s32.totalorder %s25, 1
    %p43 = por %p41, %p42
    %p44 = scmp.ne.s32.totalorder %s33, %s34
    %p45 = scmp.eq.s32.totalorder %s25, 0
    %p46 = por %p44, %p45
    %p47 = scmp.ne.s32.totalorder %s33, %s34
    %p48 = scmp.eq.s32.totalorder %s26, 1
    %p49 = por %p47, %p48
    %p51 = scmp.ne.s32.totalorder %s34, %s50
    %p52 = scmp.eq.s32.totalorder %s26, 0
    %p53 = por %p51, %p52
    %s54 = ssub.s32 %s20, %s27
    %p55 = scmp.eq.s32.totalorder %s54, 0
    %s57 = sadd.s32 %s56, 1
    %s58 = scalar_select %p55, %s56, %s57
    %p61 = pneg %p55
    %p62 = scmp.eq.s32.totalorder %s20, 1
    %p63 = por %p61, %p62
    %p64 = scmp.ne.s32.totalorder %s56, %s59
    %p65 = scmp.eq.s32.totalorder %s20, 0
    %p66 = por %p64, %p65
    %p67 = scmp.ne.s32.totalorder %s56, %s59
    %p68 = scmp.eq.s32.totalorder %s25, 1
    %p69 = por %p67, %p68
    %p70 = scmp.ne.s32.totalorder %s59, %s60
    %p71 = scmp.eq.s32.totalorder %s25, 0
    %p72 = por %p70, %p71
    %p73 = scmp.ne.s32.totalorder %s59, %s60
    %p74 = scmp.eq.s32.totalorder %s26, 1
    %p75 = por %p73, %p74
    %p77 = scmp.ne.s32.totalorder %s60, %s76
    %p78 = scmp.eq.s32.totalorder %s26, 0
    %p79 = por %p77, %p78
    %s80 = ssub.s32 %s20, %s27
    %p81 = scmp.eq.s32.totalorder %s80, 0
    %s83 = sadd.s32 %s82, 1
    %s84 = scalar_select %p81, %s82, %s83
    %p87 = pneg %p81
    %p88 = scmp.eq.s32.totalorder %s20, 1
    %p89 = por %p87, %p88
    %p90 = scmp.ne.s32.totalorder %s82, %s85
    %p91 = scmp.eq.s32.totalorder %s20, 0
    %p92 = por %p90, %p91
    %p93 = scmp.ne.s32.totalorder %s82, %s85
    %p94 = scmp.eq.s32.totalorder %s25, 1
    %p95 = por %p93, %p94
    %p96 = scmp.ne.s32.totalorder %s85, %s86
    %p97 = scmp.eq.s32.totalorder %s25, 0
    %p98 = por %p96, %p97
    %p99 = scmp.ne.s32.totalorder %s85, %s86
    %p100 = scmp.eq.s32.totalorder %s26, 1
    %p101 = por %p99, %p100
    %p103 = scmp.ne.s32.totalorder %s86, %s102
    %p104 = scmp.eq.s32.totalorder %s26, 0
    %p105 = por %p103, %p104
    %s106 = ssub.s32 %s20, %s27
    %p107 = scmp.eq.s32.totalorder %s106, 0
    %s109 = sadd.s32 %s108, 1
    %s110 = scalar_select %p107, %s108, %s109
    %p113 = pneg %p107
    %p114 = scmp.eq.s32.totalorder %s20, 1
    %p115 = por %p113, %p114
    %p116 = scmp.ne.s32.totalorder %s108, %s111
    %p117 = scmp.eq.s32.totalorder %s20, 0
    %p118 = por %p116, %p117
    %p119 = scmp.ne.s32.totalorder %s108, %s111
    %p120 = scmp.eq.s32.totalorder %s25, 1
    %p121 = por %p119, %p120
    %p122 = scmp.ne.s32.totalorder %s111, %s112
    %p123 = scmp.eq.s32.totalorder %s25, 0
    %p124 = por %p122, %p123
    %p125 = scmp.ne.s32.totalorder %s111, %s112
    %p126 = scmp.eq.s32.totalorder %s26, 1
    %p127 = por %p125, %p126
    %p129 = scmp.ne.s32.totalorder %s112, %s128
    %p130 = scmp.eq.s32.totalorder %s26, 0
    %p131 = por %p129, %p130
    %s133 = sadd.s32 %s132, 1
    %p136 = scmp.eq.s32.totalorder %s20, 1
    %p137 = scmp.ne.s32.totalorder %s132, %s134
    %p138 = scmp.eq.s32.totalorder %s20, 0
    %p139 = por %p137, %p138
    %p140 = scmp.ne.s32.totalorder %s132, %s134
    %p141 = scmp.eq.s32.totalorder %s25, 1
    %p142 = por %p140, %p141
    %p143 = scmp.ne.s32.totalorder %s134, %s135
    %p144 = scmp.eq.s32.totalorder %s25, 0
    %p145 = por %p143, %p144
    %p146 = scmp.ne.s32.totalorder %s134, %s135
    %p147 = scmp.eq.s32.totalorder %s26, 1
    %p148 = por %p146, %p147
    %p150 = scmp.ne.s32.totalorder %s135, %s149
    %p151 = scmp.eq.s32.totalorder %s26, 0
    %p152 = por %p150, %p151
    %s154 = sadd.s32 %s153, 1
    %p157 = scmp.eq.s32.totalorder %s20, 1
    %p158 = scmp.ne.s32.totalorder %s153, %s155
    %p159 = scmp.eq.s32.totalorder %s20, 0
    %p160 = por %p158, %p159
    %p161 = scmp.ne.s32.totalorder %s153, %s155
    %p162 = scmp.eq.s32.totalorder %s25, 1
    %p163 = por %p161, %p162
    %p164 = scmp.ne.s32.totalorder %s155, %s156
    %p165 = scmp.eq.s32.totalorder %s25, 0
    %p166 = por %p164, %p165
    %p167 = scmp.ne.s32.totalorder %s155, %s156
    %p168 = scmp.eq.s32.totalorder %s26, 1
    %p169 = por %p167, %p168
    %p171 = scmp.ne.s32.totalorder %s156, %s170
    %p172 = scmp.eq.s32.totalorder %s26, 0
    %p173 = por %p171, %p172
    %s175 = sadd.s32 %s174, 1
    %p178 = scmp.eq.s32.totalorder %s20, 1
    %p179 = scmp.ne.s32.totalorder %s174, %s176
    %p180 = scmp.eq.s32.totalorder %s20, 0
    %p181 = por %p179, %p180
    %p182 = scmp.ne.s32.totalorder %s174, %s176
    %p183 = scmp.eq.s32.totalorder %s25, 1
    %p184 = por %p182, %p183
    %p185 = scmp.ne.s32.totalorder %s176, %s177
    %p186 = scmp.eq.s32.totalorder %s25, 0
    %p187 = por %p185, %p186
    %p188 = scmp.ne.s32.totalorder %s176, %s177
    %p189 = scmp.eq.s32.totalorder %s26, 1
    %p190 = por %p188, %p189
    %p192 = scmp.ne.s32.totalorder %s177, %s191
    %p193 = scmp.eq.s32.totalorder %s26, 0
    %p194 = por %p192, %p193
    %s196 = sadd.s32 %s195, 1
    %p199 = scmp.eq.s32.totalorder %s20, 1
    %p200 = scmp.ne.s32.totalorder %s195, %s197
    %p201 = scmp.eq.s32.totalorder %s20, 0
    %p202 = por %p200, %p201
    %p203 = scmp.ne.s32.totalorder %s195, %s197
    %p204 = scmp.eq.s32.totalorder %s25, 1
    %p205 = por %p203, %p204
    %p206 = scmp.ne.s32.totalorder %s197, %s198
    %p207 = scmp.eq.s32.totalorder %s25, 0
    %p208 = por %p206, %p207
    %p209 = scmp.ne.s32.totalorder %s197, %s198
    %p210 = scmp.eq.s32.totalorder %s26, 1
    %p211 = por %p209, %p210
    %p213 = scmp.ne.s32.totalorder %s198, %s212
    %p214 = scmp.eq.s32.totalorder %s26, 0
    %p215 = por %p213, %p214
    %s217 = sadd.s32 %s216, 1
    %p220 = scmp.eq.s32.totalorder %s20, 1
    %p221 = scmp.ne.s32.totalorder %s216, %s218
    %p222 = scmp.eq.s32.totalorder %s20, 0
    %p223 = por %p221, %p222
    %p224 = scmp.ne.s32.totalorder %s216, %s218
    %p225 = scmp.eq.s32.totalorder %s25, 1
    %p226 = por %p224, %p225
    %p227 = scmp.ne.s32.totalorder %s218, %s219
    %p228 = scmp.eq.s32.totalorder %s25, 0
    %p229 = por %p227, %p228
    %p230 = scmp.ne.s32.totalorder %s218, %s219
    %p231 = scmp.eq.s32.totalorder %s26, 1
    %p232 = por %p230, %p231
    %p234 = scmp.ne.s32.totalorder %s219, %s233
    %p235 = scmp.eq.s32.totalorder %s26, 0
    %p236 = por %p234, %p235
    %s238 = sadd.s32 %s237, 1
    %p241 = scmp.eq.s32.totalorder %s20, 1
    %p242 = scmp.ne.s32.totalorder %s237, %s239
    %p243 = scmp.eq.s32.totalorder %s20, 0
    %p244 = por %p242, %p243
    %p245 = scmp.ne.s32.totalorder %s237, %s239
    %p246 = scmp.eq.s32.totalorder %s25, 1
    %p247 = por %p245, %p246
    %p248 = scmp.ne.s32.totalorder %s239, %s240
    %p249 = scmp.eq.s32.totalorder %s25, 0
    %p250 = por %p248, %p249
    %p251 = scmp.ne.s32.totalorder %s239, %s240
    %p252 = scmp.eq.s32.totalorder %s26, 1
    %p253 = por %p251, %p252
    %p255 = scmp.ne.s32.totalorder %s240, %s254
    %p256 = scmp.eq.s32.totalorder %s26, 0
    %p257 = por %p255, %p256
    %s259 = sadd.s32 %s258, 1
    %p262 = scmp.eq.s32.totalorder %s20, 1
    %p263 = scmp.ne.s32.totalorder %s258, %s260
    %p264 = scmp.eq.s32.totalorder %s20, 0
    %p265 = por %p263, %p264
    %p266 = scmp.ne.s32.totalorder %s258, %s260
    %p267 = scmp.eq.s32.totalorder %s25, 1
    %p268 = por %p266, %p267
    %p269 = scmp.ne.s32.totalorder %s260, %s261
    %p270 = scmp.eq.s32.totalorder %s25, 0
    %p271 = por %p269, %p270
    %p272 = scmp.ne.s32.totalorder %s260, %s261
    %p273 = scmp.eq.s32.totalorder %s26, 1
    %p274 = por %p272, %p273
    %p276 = scmp.ne.s32.totalorder %s261, %s275
    %p277 = scmp.eq.s32.totalorder %s26, 0
    %p278 = por %p276, %p277
    %s279 = ssub.s32 %s20, %s27
    %p280 = scmp.eq.s32.totalorder %s279, 0
    %s282 = sadd.s32 %s281, 1
    %s283 = scalar_select %p280, %s281, %s282
    %p286 = pneg %p280
    %p287 = scmp.eq.s32.totalorder %s20, 1
    %p288 = por %p286, %p287
    %p289 = scmp.ne.s32.totalorder %s281, %s284
    %p290 = scmp.eq.s32.totalorder %s20, 0
    %p291 = por %p289, %p290
    %p292 = scmp.ne.s32.totalorder %s281, %s284
    %p293 = scmp.eq.s32.totalorder %s25, 1
    %p294 = por %p292, %p293
    %p295 = scmp.ne.s32.totalorder %s284, %s285
    %p296 = scmp.eq.s32.totalorder %s25, 0
    %p297 = por %p295, %p296
    %p298 = scmp.ne.s32.totalorder %s284, %s285
    %p299 = scmp.eq.s32.totalorder %s26, 1
    %p300 = por %p298, %p299
    %p302 = scmp.ne.s32.totalorder %s285, %s301
    %p303 = scmp.eq.s32.totalorder %s26, 0
    %p304 = por %p302, %p303
    %s305 = ssub.s32 %s20, %s27
    %p306 = scmp.eq.s32.totalorder %s305, 0
    %s308 = sadd.s32 %s307, 1
    %s309 = scalar_select %p306, %s307, %s308
    %p312 = pneg %p306
    %p313 = scmp.eq.s32.totalorder %s20, 1
    %p314 = por %p312, %p313
    %p315 = scmp.ne.s32.totalorder %s307, %s310
    %p316 = scmp.eq.s32.totalorder %s20, 0
    %p317 = por %p315, %p316
    %p318 = scmp.ne.s32.totalorder %s307, %s310
    %p319 = scmp.eq.s32.totalorder %s25, 1
    %p320 = por %p318, %p319
    %p321 = scmp.ne.s32.totalorder %s310, %s311
    %p322 = scmp.eq.s32.totalorder %s25, 0
    %p323 = por %p321, %p322
    %p324 = scmp.ne.s32.totalorder %s310, %s311
    %p325 = scmp.eq.s32.totalorder %s26, 1
    %p326 = por %p324, %p325
    %p328 = scmp.ne.s32.totalorder %s311, %s327
    %p329 = scmp.eq.s32.totalorder %s26, 0
    %p330 = por %p328, %p329
    %s331 = ssub.s32 %s20, %s27
    %p332 = scmp.eq.s32.totalorder %s331, 0
    %s334 = sadd.s32 %s333, 1
    %s335 = scalar_select %p332, %s333, %s334
    %p338 = pneg %p332
    %p339 = scmp.eq.s32.totalorder %s20, 1
    %p340 = por %p338, %p339
    %p341 = scmp.ne.s32.totalorder %s333, %s336
    %p342 = scmp.eq.s32.totalorder %s20, 0
    %p343 = por %p341, %p342
    %p344 = scmp.ne.s32.totalorder %s333, %s336
    %p345 = scmp.eq.s32.totalorder %s25, 1
    %p346 = por %p344, %p345
    %p347 = scmp.ne.s32.totalorder %s336, %s337
    %p348 = scmp.eq.s32.totalorder %s25, 0
    %p349 = por %p347, %p348
    %p350 = scmp.ne.s32.totalorder %s336, %s337
    %p351 = scmp.eq.s32.totalorder %s26, 1
    %p352 = por %p350, %p351
    %p354 = scmp.ne.s32.totalorder %s337, %s353
    %p355 = scmp.eq.s32.totalorder %s26, 0
    %p356 = por %p354, %p355
    %p357 = scmp.le.s32.totalorder 1, %s20
    %p358 = scmp.lt.s32.totalorder %s20, 3
    %p359 = pnand %p357, %p358
    %p360 = pneg %p359
    // Predicated region
    $region9: #{bfn_forward.1} parent=5 // pred_check
      _
    $region10: #{bfn_forward.1} parent=5 // pred_check_branch
      %362 = sbr.rel (%p359) target = $region12
    $region11: #{bfn_forward.1} parent=5 // pred_region
      %s363 = ssub.s32 %s20, 1
      // Predicated region
      $region13: #{bfn_forward.1} parent=11 // pred_check
        %p364 = pneg %p145
      $region14: #{bfn_forward.1} parent=11 // pred_check_branch
        %366 = sbr.rel (%p364) target = $region16
      $region15: #{bfn_forward.1} parent=11 // pred_region
        _
      $region16: #{bfn_forward.1} parent=11 // pred_fallthru
        _
      // Predicated region
      $region17: #{bfn_forward.1} parent=11 // pred_check
        %p367 = pneg %p166
      $region18: #{bfn_forward.1} parent=11 // pred_check_branch
        %369 = sbr.rel (%p367) target = $region20
      $region19: #{bfn_forward.1} parent=11 // pred_region
        _
      $region20: #{bfn_forward.1} parent=11 // pred_fallthru
        _
      // Predicated region
      $region21: #{bfn_forward.1} parent=11 // pred_check
        %p370 = pneg %p187
      $region22: #{bfn_forward.1} parent=11 // pred_check_branch
        %372 = sbr.rel (%p370) target = $region24
      $region23: #{bfn_forward.1} parent=11 // pred_region
        _
      $region24: #{bfn_forward.1} parent=11 // pred_fallthru
        _
      // Predicated region
      $region25: #{bfn_forward.1} parent=11 // pred_check
        %p373 = pneg %p208
      $region26: #{bfn_forward.1} parent=11 // pred_check_branch
        %375 = sbr.rel (%p373) target = $region28
      $region27: #{bfn_forward.1} parent=11 // pred_region
        _
      $region28: #{bfn_forward.1} parent=11 // pred_fallthru
        _
      // Predicated region
      $region29: #{bfn_forward.1} parent=11 // pred_check
        %p376 = pneg %p229
      $region30: #{bfn_forward.1} parent=11 // pred_check_branch
        %378 = sbr.rel (%p376) target = $region32
      $region31: #{bfn_forward.1} parent=11 // pred_region
        _
      $region32: #{bfn_forward.1} parent=11 // pred_fallthru
        _
      // Predicated region
      $region33: #{bfn_forward.1} parent=11 // pred_check
        %p379 = pneg %p250
      $region34: #{bfn_forward.1} parent=11 // pred_check_branch
        %381 = sbr.rel (%p379) target = $region36
      $region35: #{bfn_forward.1} parent=11 // pred_region
        _
      $region36: #{bfn_forward.1} parent=11 // pred_fallthru
        _
      // Predicated region
      $region37: #{bfn_forward.1} parent=11 // pred_check
        %p382 = pneg %p271
      $region38: #{bfn_forward.1} parent=11 // pred_check_branch
        %384 = sbr.rel (%p382) target = $region40
      $region39: #{bfn_forward.1} parent=11 // pred_region
        _
      $region40: #{bfn_forward.1} parent=11 // pred_fallthru
        _
    $region12: #{bfn_forward.1} parent=5 // pred_fallthru
      _
    %p385 = scmp.lt.s32.totalorder %s20, 2
    // Predicated region
    $region41: #{bfn_forward.1} parent=5 // pred_check
      %p386 = pneg %p385
    $region42: #{bfn_forward.1} parent=5 // pred_check_branch
      %388 = sbr.rel (%p386) target = $region44
    $region43: #{bfn_forward.1} parent=5 // pred_region
      // Predicated region
      $region45: #{bfn_forward.1} parent=43 // pred_check
        %p389 = pneg %p40
      $region46: #{bfn_forward.1} parent=43 // pred_check_branch
        %391 = sbr.rel (%p389) target = $region48
      $region47: #{bfn_forward.1} parent=43 // pred_region
        %s392 = smul.u32 16, %s20
        %p393 = scmp.lt.s32.totalorder %s392, 31
        %s394 = scalar_select %p393, %s392, 31
        %s395 = smul.addr %s394, 8
        %s396 = scalar_lea.vmem %s0, %s395
        %s397 = smul.u32 16, %s20
      $region48: #{bfn_forward.1} parent=43 // pred_fallthru
        _
      // Predicated region
      $region49: #{bfn_forward.1} parent=43 // pred_check
        %p398 = pneg %p66
      $region50: #{bfn_forward.1} parent=43 // pred_check_branch
        %400 = sbr.rel (%p398) target = $region52
      $region51: #{bfn_forward.1} parent=43 // pred_region
        %s401 = smul.u32 16, %s20
        %p402 = scmp.lt.s32.totalorder %s401, 31
        %s403 = scalar_select %p402, %s401, 31
        %s404 = smul.addr %s403, 8
        %s405 = scalar_lea.vmem %s1, %s404
        %s406 = smul.u32 16, %s20
      $region52: #{bfn_forward.1} parent=43 // pred_fallthru
        _
      // Predicated region
      $region53: #{bfn_forward.1} parent=43 // pred_check
        %p407 = pneg %p92
      $region54: #{bfn_forward.1} parent=43 // pred_check_branch
        %409 = sbr.rel (%p407) target = $region56
      $region55: #{bfn_forward.1} parent=43 // pred_region
        %s410 = smul.u32 16, %s20
        %p411 = scmp.lt.s32.totalorder %s410, 31
        %s412 = scalar_select %p411, %s410, 31
        %s413 = smul.addr %s412, 8
        %s414 = scalar_lea.vmem %s2, %s413
        %s415 = smul.u32 16, %s20
      $region56: #{bfn_forward.1} parent=43 // pred_fallthru
        _
      // Predicated region
      $region57: #{bfn_forward.1} parent=43 // pred_check
        %p416 = pneg %p118
      $region58: #{bfn_forward.1} parent=43 // pred_check_branch
        %418 = sbr.rel (%p416) target = $region60
      $region59: #{bfn_forward.1} parent=43 // pred_region
        %s419 = smul.u32 2, %s20
        %p420 = scmp.lt.s32.totalorder %s419, 3
        %s421 = scalar_select %p420, %s419, 3
        %s422 = smul.addr %s421, 8
        %s423 = scalar_lea.vmem %s3, %s422
        %s424 = smul.u32 2, %s20
      $region60: #{bfn_forward.1} parent=43 // pred_fallthru
        _
    $region44: #{bfn_forward.1} parent=5 // pred_fallthru
      _
    %p425 = scmp.le.s32.totalorder 1, %s20
    %p426 = scmp.lt.s32.totalorder %s20, 3
    %p427 = pnand %p425, %p426
    %p428 = pneg %p427
    // Predicated region
    $region61: #{bfn_forward.1} parent=5 // pred_check
      _
    $region62: #{bfn_forward.1} parent=5 // pred_check_branch
      %430 = sbr.rel (%p427) target = $region64
    $region63: #{bfn_forward.1} parent=5 // pred_region
      %s431 = ssub.s32 %s20, 1
      %s432 = smul.u32 16, %s25
      %p433 = scmp.lt.s32.totalorder %s432, 31
      %s434 = scalar_select %p433, %s432, 31
      %s435 = smul.addr %s434, 8
      %s436 = scalar_lea.vmem %s0, %s435
      %p437 = pneg %p46
      %p438 = pneg %p43
      %s439 = smul.u32 16, %s25
      %p440 = scmp.lt.s32.totalorder %s439, 31
      %s441 = scalar_select %p440, %s439, 31
      %s442 = smul.addr %s441, 8
      %s443 = scalar_lea.vmem %s1, %s442
      %p444 = pneg %p72
      %p445 = pneg %p69
      %s446 = smul.u32 16, %s25
      %p447 = scmp.lt.s32.totalorder %s446, 31
      %s448 = scalar_select %p447, %s446, 31
      %s449 = smul.addr %s448, 8
      %s450 = scalar_lea.vmem %s2, %s449
      %p451 = pneg %p98
      %p452 = pneg %p95
      %s453 = smul.u32 2, %s25
      %p454 = scmp.lt.s32.totalorder %s453, 3
      %s455 = scalar_select %p454, %s453, 3
      %s456 = smul.addr %s455, 8
      %s457 = scalar_lea.vmem %s3, %s456
      %p458 = pneg %p124
      %p459 = pneg %p121
      %p460 = pneg %p145
      %p461 = pneg %p142
      %p462 = pneg %p166
      %p463 = pneg %p163
      %p464 = pneg %p187
      %p465 = pneg %p184
      %p466 = pneg %p208
      %p467 = pneg %p205
      %p468 = pneg %p229
      %p469 = pneg %p226
      %p470 = pneg %p250
      %p471 = pneg %p247
      %p472 = pneg %p271
      %p473 = pneg %p268
      %p474 = pneg %p297
      %p475 = pneg %p294
      %s476 = smul.u32 16, %s25
      %p477 = scmp.lt.s32.totalorder %s476, 31
      %s478 = scalar_select %p477, %s476, 31
      %s479 = smul.addr %s478, 8
      %s480 = scalar_lea.vmem %s11, %s479
      %p481 = pneg %p323
      %p482 = pneg %p320
      %p483 = scmp.lt.s32.totalorder %s25, 1
      %s484 = scalar_select %p483, %s25, 1
      %s485 = scalar_lea.vmem %s12, %s484
      %p486 = pneg %p349
      %p487 = pneg %p346
      %s488 = smul.u32 2, %s25
      %p489 = scmp.lt.s32.totalorder %s488, 3
      %s490 = scalar_select %p489, %s488, 3
      %s491 = smul.addr %s490, 8
      %s492 = scalar_lea.vmem %s13, %s491
      %s493 = smul.u32 16, %s25
      %p494 = scmp.lt.s32.totalorder %s493, 31
      %s495 = scalar_select %p494, %s493, 31
      %s496 = smul.addr %s495, 8
      %s497 = scalar_lea.vmem %s0, %s496
      %s498 = smul.u32 16, %s25
      %s499 = smul.u32 16, %s25
      %p500 = scmp.lt.s32.totalorder %s499, 31
      %s501 = scalar_select %p500, %s499, 31
      %s502 = smul.addr %s501, 8
      %s503 = scalar_lea.vmem %s1, %s502
      %s504 = smul.u32 16, %s25
      %s505 = smul.u32 16, %s25
      %p506 = scmp.lt.s32.totalorder %s505, 31
      %s507 = scalar_select %p506, %s505, 31
      %s508 = smul.addr %s507, 8
      %s509 = scalar_lea.vmem %s2, %s508
      %s510 = smul.u32 16, %s25
      %s511 = smul.u32 2, %s25
      %p512 = scmp.lt.s32.totalorder %s511, 3
      %s513 = scalar_select %p512, %s511, 3
      %s514 = smul.addr %s513, 8
      %s515 = scalar_lea.vmem %s3, %s514
      %s516 = smul.u32 2, %s25
      %s517 = smul.u32 16, %s25
      %p518 = scmp.lt.s32.totalorder %s517, 31
      %s519 = scalar_select %p518, %s517, 31
      %s520 = smul.addr %s519, 8
      %s521 = scalar_lea.vmem %s11, %s520
      %s522 = smul.u32 16, %s25
      %p523 = scmp.lt.s32.totalorder %s25, 1
      %s524 = scalar_select %p523, %s25, 1
      %s525 = scalar_lea.vmem %s12, %s524
      %s526 = smul.u32 2, %s25
      %p527 = scmp.lt.s32.totalorder %s526, 3
      %s528 = scalar_select %p527, %s526, 3
      %s529 = smul.addr %s528, 8
      %s530 = scalar_lea.vmem %s13, %s529
      %s531 = smul.u32 2, %s25
      %v533 = vld [vmem:[%s497] sm:$0xff]
      %v534 = vld [vmem:[%s497 + $0x8] sm:$0xff]
      %v535 = vld [vmem:[%s497 + $0x10] sm:$0xff]
      %v536 = vld [vmem:[%s497 + $0x18] sm:$0xff]
      %v537 = vld [vmem:[%s497 + $0x20] sm:$0xff]
      %v538 = vld [vmem:[%s497 + $0x28] sm:$0xff]
      %v539 = vld [vmem:[%s497 + $0x30] sm:$0xff]
      %v540 = vld [vmem:[%s497 + $0x38] sm:$0xff]
      %v541 = vld [vmem:[%s497 + $0x40] sm:$0xff]
      %v542 = vld [vmem:[%s497 + $0x48] sm:$0xff]
      %v543 = vld [vmem:[%s497 + $0x50] sm:$0xff]
      %v544 = vld [vmem:[%s497 + $0x58] sm:$0xff]
      %v545 = vld [vmem:[%s497 + $0x60] sm:$0xff]
      %v546 = vld [vmem:[%s497 + $0x68] sm:$0xff]
      %v547 = vld [vmem:[%s497 + $0x70] sm:$0xff]
      %v548 = vld [vmem:[%s497 + $0x78] sm:$0xff]
      %v549 = vlaneseq
      %v550 = vand.u32 %v549, 127
      %551 = vset.pattern.permute.xlu0 0
      %552 = vperm.xlu0 %551, %v533
      %v553 = vpop.permute.xlu0 %552
      %554 = vset.pattern.permute.xlu0 0
      %555 = vperm.xlu0 %554, %v534
      %v556 = vpop.permute.xlu0 %555
      %557 = vset.pattern.permute.xlu0 0
      %558 = vperm.xlu0 %557, %v535
      %v559 = vpop.permute.xlu0 %558
      %560 = vset.pattern.permute.xlu0 0
      %561 = vperm.xlu0 %560, %v536
      %v562 = vpop.permute.xlu0 %561
      %563 = vset.pattern.permute.xlu0 0
      %564 = vperm.xlu0 %563, %v537
      %v565 = vpop.permute.xlu0 %564
      %566 = vset.pattern.permute.xlu0 0
      %567 = vperm.xlu0 %566, %v538
      %v568 = vpop.permute.xlu0 %567
      %569 = vset.pattern.permute.xlu0 0
      %570 = vperm.xlu0 %569, %v539
      %v571 = vpop.permute.xlu0 %570
      %572 = vset.pattern.permute.xlu0 0
      %573 = vperm.xlu0 %572, %v540
      %v574 = vpop.permute.xlu0 %573
      %575 = vset.pattern.permute.xlu0 0
      %576 = vperm.xlu0 %575, %v541
      %v577 = vpop.permute.xlu0 %576
      %578 = vset.pattern.permute.xlu0 0
      %579 = vperm.xlu0 %578, %v542
      %v580 = vpop.permute.xlu0 %579
      %581 = vset.pattern.permute.xlu0 0
      %582 = vperm.xlu0 %581, %v543
      %v583 = vpop.permute.xlu0 %582
      %584 = vset.pattern.permute.xlu0 0
      %585 = vperm.xlu0 %584, %v544
      %v586 = vpop.permute.xlu0 %585
      %587 = vset.pattern.permute.xlu0 0
      %588 = vperm.xlu0 %587, %v545
      %v589 = vpop.permute.xlu0 %588
      %590 = vset.pattern.permute.xlu0 0
      %591 = vperm.xlu0 %590, %v546
      %v592 = vpop.permute.xlu0 %591
      %593 = vset.pattern.permute.xlu0 0
      %594 = vperm.xlu0 %593, %v547
      %v595 = vpop.permute.xlu0 %594
      %596 = vset.pattern.permute.xlu0 0
      %597 = vperm.xlu0 %596, %v548
      %v598 = vpop.permute.xlu0 %597
      %vm599 = vcmp.eq.s32.totalorder %v553, %v550
      %vm600 = vcmp.eq.s32.totalorder %v556, %v550
      %vm601 = vcmp.eq.s32.totalorder %v559, %v550
      %vm602 = vcmp.eq.s32.totalorder %v562, %v550
      %vm603 = vcmp.eq.s32.totalorder %v565, %v550
      %vm604 = vcmp.eq.s32.totalorder %v568, %v550
      %vm605 = vcmp.eq.s32.totalorder %v571, %v550
      %vm606 = vcmp.eq.s32.totalorder %v574, %v550
      %vm607 = vcmp.eq.s32.totalorder %v577, %v550
      %vm608 = vcmp.eq.s32.totalorder %v580, %v550
      %vm609 = vcmp.eq.s32.totalorder %v583, %v550
      %vm610 = vcmp.eq.s32.totalorder %v586, %v550
      %vm611 = vcmp.eq.s32.totalorder %v589, %v550
      %vm612 = vcmp.eq.s32.totalorder %v592, %v550
      %vm613 = vcmp.eq.s32.totalorder %v595, %v550
      %vm614 = vcmp.eq.s32.totalorder %v598, %v550
      %v615 = vsel %vm599, 1, 0
      %v616 = vsel %vm600, 1, 0
      %v617 = vsel %vm601, 1, 0
      %v618 = vsel %vm602, 1, 0
      %v619 = vsel %vm603, 1, 0
      %v620 = vsel %vm604, 1, 0
      %v621 = vsel %vm605, 1, 0
      %v622 = vsel %vm606, 1, 0
      %v623 = vsel %vm607, 1, 0
      %v624 = vsel %vm608, 1, 0
      %v625 = vsel %vm609, 1, 0
      %v626 = vsel %vm610, 1, 0
      %v627 = vsel %vm611, 1, 0
      %v628 = vsel %vm612, 1, 0
      %v629 = vsel %vm613, 1, 0
      %v630 = vsel %vm614, 1, 0
      %v631 = vcvt.s32.f32 %v615
      %v632 = vcvt.s32.f32 %v616
      %v633 = vcvt.s32.f32 %v617
      %v634 = vcvt.s32.f32 %v618
      %v635 = vcvt.s32.f32 %v619
      %v636 = vcvt.s32.f32 %v620
      %v637 = vcvt.s32.f32 %v621
      %v638 = vcvt.s32.f32 %v622
      %v639 = vcvt.s32.f32 %v623
      %v640 = vcvt.s32.f32 %v624
      %v641 = vcvt.s32.f32 %v625
      %v642 = vcvt.s32.f32 %v626
      %v643 = vcvt.s32.f32 %v627
      %v644 = vcvt.s32.f32 %v628
      %v645 = vcvt.s32.f32 %v629
      %v646 = vcvt.s32.f32 %v630
      %v647 = vld [vmem:[%s503] sm:$0xff]
      %v648 = vld [vmem:[%s503 + $0x8] sm:$0xff]
      %v649 = vld [vmem:[%s503 + $0x10] sm:$0xff]
      %v650 = vld [vmem:[%s503 + $0x18] sm:$0xff]
      %v651 = vld [vmem:[%s503 + $0x20] sm:$0xff]
      %v652 = vld [vmem:[%s503 + $0x28] sm:$0xff]
      %v653 = vld [vmem:[%s503 + $0x30] sm:$0xff]
      %v654 = vld [vmem:[%s503 + $0x38] sm:$0xff]
      %v655 = vld [vmem:[%s503 + $0x40] sm:$0xff]
      %v656 = vld [vmem:[%s503 + $0x48] sm:$0xff]
      %v657 = vld [vmem:[%s503 + $0x50] sm:$0xff]
      %v658 = vld [vmem:[%s503 + $0x58] sm:$0xff]
      %v659 = vld [vmem:[%s503 + $0x60] sm:$0xff]
      %v660 = vld [vmem:[%s503 + $0x68] sm:$0xff]
      %v661 = vld [vmem:[%s503 + $0x70] sm:$0xff]
      %v662 = vld [vmem:[%s503 + $0x78] sm:$0xff]
      %v663 = vmul.f32 %v647, 3.0
      %v664 = vmul.f32 %v648, 3.0
      %v665 = vmul.f32 %v649, 3.0
      %v666 = vmul.f32 %v650, 3.0
      %v667 = vmul.f32 %v651, 3.0
      %v668 = vmul.f32 %v652, 3.0
      %v669 = vmul.f32 %v653, 3.0
      %v670 = vmul.f32 %v654, 3.0
      %v671 = vmul.f32 %v655, 3.0
      %v672 = vmul.f32 %v656, 3.0
      %v673 = vmul.f32 %v657, 3.0
      %v674 = vmul.f32 %v658, 3.0
      %v675 = vmul.f32 %v659, 3.0
      %v676 = vmul.f32 %v660, 3.0
      %v677 = vmul.f32 %v661, 3.0
      %v678 = vmul.f32 %v662, 3.0
      %v679 = vmul.f32 %v663, %v647
      %v680 = vmul.f32 %v664, %v648
      %v681 = vmul.f32 %v665, %v649
      %v682 = vmul.f32 %v666, %v650
      %v683 = vmul.f32 %v667, %v651
      %v684 = vmul.f32 %v668, %v652
      %v685 = vmul.f32 %v669, %v653
      %v686 = vmul.f32 %v670, %v654
      %v687 = vmul.f32 %v671, %v655
      %v688 = vmul.f32 %v672, %v656
      %v689 = vmul.f32 %v673, %v657
      %v690 = vmul.f32 %v674, %v658
      %v691 = vmul.f32 %v675, %v659
      %v692 = vmul.f32 %v676, %v660
      %v693 = vmul.f32 %v677, %v661
      %v694 = vmul.f32 %v678, %v662
      %v695 = vmul.f32 %v631, 32.0
      %v696 = vmul.f32 %v632, 32.0
      %v697 = vmul.f32 %v633, 32.0
      %v698 = vmul.f32 %v634, 32.0
      %v699 = vmul.f32 %v635, 32.0
      %v700 = vmul.f32 %v636, 32.0
      %v701 = vmul.f32 %v637, 32.0
      %v702 = vmul.f32 %v638, 32.0
      %v703 = vmul.f32 %v639, 32.0
      %v704 = vmul.f32 %v640, 32.0
      %v705 = vmul.f32 %v641, 32.0
      %v706 = vmul.f32 %v642, 32.0
      %v707 = vmul.f32 %v643, 32.0
      %v708 = vmul.f32 %v644, 32.0
      %v709 = vmul.f32 %v645, 32.0
      %v710 = vmul.f32 %v646, 32.0
      %v711 = vsub.f32 %v695, 1.0
      %v712 = vsub.f32 %v696, 1.0
      %v713 = vsub.f32 %v697, 1.0
      %v714 = vsub.f32 %v698, 1.0
      %v715 = vsub.f32 %v699, 1.0
      %v716 = vsub.f32 %v700, 1.0
      %v717 = vsub.f32 %v701, 1.0
      %v718 = vsub.f32 %v702, 1.0
      %v719 = vsub.f32 %v703, 1.0
      %v720 = vsub.f32 %v704, 1.0
      %v721 = vsub.f32 %v705, 1.0
      %v722 = vsub.f32 %v706, 1.0
      %v723 = vsub.f32 %v707, 1.0
      %v724 = vsub.f32 %v708, 1.0
      %v725 = vsub.f32 %v709, 1.0
      %v726 = vsub.f32 %v710, 1.0
      %728 = vset.pattern.permute.xlu0 0
      %729 = vperm.xlu0 %728, %v679
      %v730 = vpop.permute.xlu0 %729
      %733 = vset.pattern.permute.xlu0 0
      %734 = vperm.xlu0 %733, %v680
      %v735 = vpop.permute.xlu0 %734
      %738 = vset.pattern.permute.xlu0 0
      %739 = vperm.xlu0 %738, %v681
      %v740 = vpop.permute.xlu0 %739
      %743 = vset.pattern.permute.xlu0 0
      %744 = vperm.xlu0 %743, %v682
      %v745 = vpop.permute.xlu0 %744
      %748 = vset.pattern.permute.xlu0 0
      %749 = vperm.xlu0 %748, %v683
      %v750 = vpop.permute.xlu0 %749
      %753 = vset.pattern.permute.xlu0 0
      %754 = vperm.xlu0 %753, %v684
      %v755 = vpop.permute.xlu0 %754
      %758 = vset.pattern.permute.xlu0 0
      %759 = vperm.xlu0 %758, %v685
      %v760 = vpop.permute.xlu0 %759
      %763 = vset.pattern.permute.xlu0 0
      %764 = vperm.xlu0 %763, %v686
      %v765 = vpop.permute.xlu0 %764
      %768 = vset.pattern.permute.xlu0 0
      %769 = vperm.xlu0 %768, %v687
      %v770 = vpop.permute.xlu0 %769
      %773 = vset.pattern.permute.xlu0 0
      %774 = vperm.xlu0 %773, %v688
      %v775 = vpop.permute.xlu0 %774
      %778 = vset.pattern.permute.xlu0 0
      %779 = vperm.xlu0 %778, %v689
      %v780 = vpop.permute.xlu0 %779
      %783 = vset.pattern.permute.xlu0 0
      %784 = vperm.xlu0 %783, %v690
      %v785 = vpop.permute.xlu0 %784
      %788 = vset.pattern.permute.xlu0 0
      %789 = vperm.xlu0 %788, %v691
      %v790 = vpop.permute.xlu0 %789
      %793 = vset.pattern.permute.xlu0 0
      %794 = vperm.xlu0 %793, %v692
      %v795 = vpop.permute.xlu0 %794
      %798 = vset.pattern.permute.xlu0 0
      %799 = vperm.xlu0 %798, %v693
      %v800 = vpop.permute.xlu0 %799
      %803 = vset.pattern.permute.xlu0 0
      %804 = vperm.xlu0 %803, %v694
      %v805 = vpop.permute.xlu0 %804
      %v807 = vmul.f32 %v730, %v711
      %v808 = vmul.f32 %v735, %v712
      %v809 = vmul.f32 %v740, %v713
      %v810 = vmul.f32 %v745, %v714
      %v811 = vmul.f32 %v750, %v715
      %v812 = vmul.f32 %v755, %v716
      %v813 = vmul.f32 %v760, %v717
      %v814 = vmul.f32 %v765, %v718
      %v815 = vmul.f32 %v770, %v719
      %v816 = vmul.f32 %v775, %v720
      %v817 = vmul.f32 %v780, %v721
      %v818 = vmul.f32 %v785, %v722
      %v819 = vmul.f32 %v790, %v723
      %v820 = vmul.f32 %v795, %v724
      %v821 = vmul.f32 %v800, %v725
      %v822 = vmul.f32 %v805, %v726
      %v823 = vmul.f32 %v679, 32.0
      %v824 = vmul.f32 %v680, 32.0
      %v825 = vmul.f32 %v681, 32.0
      %v826 = vmul.f32 %v682, 32.0
      %v827 = vmul.f32 %v683, 32.0
      %v828 = vmul.f32 %v684, 32.0
      %v829 = vmul.f32 %v685, 32.0
      %v830 = vmul.f32 %v686, 32.0
      %v831 = vmul.f32 %v687, 32.0
      %v832 = vmul.f32 %v688, 32.0
      %v833 = vmul.f32 %v689, 32.0
      %v834 = vmul.f32 %v690, 32.0
      %v835 = vmul.f32 %v691, 32.0
      %v836 = vmul.f32 %v692, 32.0
      %v837 = vmul.f32 %v693, 32.0
      %v838 = vmul.f32 %v694, 32.0
      %v839 = vrsqrt.pop %v823
      %v840 = vmul.f32 %v823, %v839
      %vm841 = vcmp.eq.f32.partialorder %v823, inf
      %v842 = vsel %vm841, %v823, %v840
      %vm843 = vcmp.eq.f32.partialorder %v823, 0.0
      %v844 = vand.u32 %v823, 2147483648
      %v845 = vsel %vm843, %v844, %v842
      %v846 = vrsqrt.pop %v824
      %v847 = vmul.f32 %v824, %v846
      %vm848 = vcmp.eq.f32.partialorder %v824, inf
      %v849 = vsel %vm848, %v824, %v847
      %vm850 = vcmp.eq.f32.partialorder %v824, 0.0
      %v851 = vand.u32 %v824, 2147483648
      %v852 = vsel %vm850, %v851, %v849
      %v853 = vrsqrt.pop %v825
      %v854 = vmul.f32 %v825, %v853
      %vm855 = vcmp.eq.f32.partialorder %v825, inf
      %v856 = vsel %vm855, %v825, %v854
      %vm857 = vcmp.eq.f32.partialorder %v825, 0.0
      %v858 = vand.u32 %v825, 2147483648
      %v859 = vsel %vm857, %v858, %v856
      %v860 = vrsqrt.pop %v826
      %v861 = vmul.f32 %v826, %v860
      %vm862 = vcmp.eq.f32.partialorder %v826, inf
      %v863 = vsel %vm862, %v826, %v861
      %vm864 = vcmp.eq.f32.partialorder %v826, 0.0
      %v865 = vand.u32 %v826, 2147483648
      %v866 = vsel %vm864, %v865, %v863
      %v867 = vrsqrt.pop %v827
      %v868 = vmul.f32 %v827, %v867
      %vm869 = vcmp.eq.f32.partialorder %v827, inf
      %v870 = vsel %vm869, %v827, %v868
      %vm871 = vcmp.eq.f32.partialorder %v827, 0.0
      %v872 = vand.u32 %v827, 2147483648
      %v873 = vsel %vm871, %v872, %v870
      %v874 = vrsqrt.pop %v828
      %v875 = vmul.f32 %v828, %v874
      %vm876 = vcmp.eq.f32.partialorder %v828, inf
      %v877 = vsel %vm876, %v828, %v875
      %vm878 = vcmp.eq.f32.partialorder %v828, 0.0
      %v879 = vand.u32 %v828, 2147483648
      %v880 = vsel %vm878, %v879, %v877
      %v881 = vrsqrt.pop %v829
      %v882 = vmul.f32 %v829, %v881
      %vm883 = vcmp.eq.f32.partialorder %v829, inf
      %v884 = vsel %vm883, %v829, %v882
      %vm885 = vcmp.eq.f32.partialorder %v829, 0.0
      %v886 = vand.u32 %v829, 2147483648
      %v887 = vsel %vm885, %v886, %v884
      %v888 = vrsqrt.pop %v830
      %v889 = vmul.f32 %v830, %v888
      %vm890 = vcmp.eq.f32.partialorder %v830, inf
      %v891 = vsel %vm890, %v830, %v889
      %vm892 = vcmp.eq.f32.partialorder %v830, 0.0
      %v893 = vand.u32 %v830, 2147483648
      %v894 = vsel %vm892, %v893, %v891
      %v895 = vrsqrt.pop %v831
      %v896 = vmul.f32 %v831, %v895
      %vm897 = vcmp.eq.f32.partialorder %v831, inf
      %v898 = vsel %vm897, %v831, %v896
      %vm899 = vcmp.eq.f32.partialorder %v831, 0.0
      %v900 = vand.u32 %v831, 2147483648
      %v901 = vsel %vm899, %v900, %v898
      %v902 = vrsqrt.pop %v832
      %v903 = vmul.f32 %v832, %v902
      %vm904 = vcmp.eq.f32.partialorder %v832, inf
      %v905 = vsel %vm904, %v832, %v903
      %vm906 = vcmp.eq.f32.partialorder %v832, 0.0
      %v907 = vand.u32 %v832, 2147483648
      %v908 = vsel %vm906, %v907, %v905
      %v909 = vrsqrt.pop %v833
      %v910 = vmul.f32 %v833, %v909
      %vm911 = vcmp.eq.f32.partialorder %v833, inf
      %v912 = vsel %vm911, %v833, %v910
      %vm913 = vcmp.eq.f32.partialorder %v833, 0.0
      %v914 = vand.u32 %v833, 2147483648
      %v915 = vsel %vm913, %v914, %v912
      %v916 = vrsqrt.pop %v834
      %v917 = vmul.f32 %v834, %v916
      %vm918 = vcmp.eq.f32.partialorder %v834, inf
      %v919 = vsel %vm918, %v834, %v917
      %vm920 = vcmp.eq.f32.partialorder %v834, 0.0
      %v921 = vand.u32 %v834, 2147483648
      %v922 = vsel %vm920, %v921, %v919
      %v923 = vrsqrt.pop %v835
      %v924 = vmul.f32 %v835, %v923
      %vm925 = vcmp.eq.f32.partialorder %v835, inf
      %v926 = vsel %vm925, %v835, %v924
      %vm927 = vcmp.eq.f32.partialorder %v835, 0.0
      %v928 = vand.u32 %v835, 2147483648
      %v929 = vsel %vm927, %v928, %v926
      %v930 = vrsqrt.pop %v836
      %v931 = vmul.f32 %v836, %v930
      %vm932 = vcmp.eq.f32.partialorder %v836, inf
      %v933 = vsel %vm932, %v836, %v931
      %vm934 = vcmp.eq.f32.partialorder %v836, 0.0
      %v935 = vand.u32 %v836, 2147483648
      %v936 = vsel %vm934, %v935, %v933
      %v937 = vrsqrt.pop %v837
      %v938 = vmul.f32 %v837, %v937
      %vm939 = vcmp.eq.f32.partialorder %v837, inf
      %v940 = vsel %vm939, %v837, %v938
      %vm941 = vcmp.eq.f32.partialorder %v837, 0.0
      %v942 = vand.u32 %v837, 2147483648
      %v943 = vsel %vm941, %v942, %v940
      %v944 = vrsqrt.pop %v838
      %v945 = vmul.f32 %v838, %v944
      %vm946 = vcmp.eq.f32.partialorder %v838, inf
      %v947 = vsel %vm946, %v838, %v945
      %vm948 = vcmp.eq.f32.partialorder %v838, 0.0
      %v949 = vand.u32 %v838, 2147483648
      %v950 = vsel %vm948, %v949, %v947
      %v951 = vld [vmem:[%s509] sm:$0xff]
      %v952 = vld [vmem:[%s509 + $0x8] sm:$0xff]
      %v953 = vld [vmem:[%s509 + $0x10] sm:$0xff]
      %v954 = vld [vmem:[%s509 + $0x18] sm:$0xff]
      %v955 = vld [vmem:[%s509 + $0x20] sm:$0xff]
      %v956 = vld [vmem:[%s509 + $0x28] sm:$0xff]
      %v957 = vld [vmem:[%s509 + $0x30] sm:$0xff]
      %v958 = vld [vmem:[%s509 + $0x38] sm:$0xff]
      %v959 = vld [vmem:[%s509 + $0x40] sm:$0xff]
      %v960 = vld [vmem:[%s509 + $0x48] sm:$0xff]
      %v961 = vld [vmem:[%s509 + $0x50] sm:$0xff]
      %v962 = vld [vmem:[%s509 + $0x58] sm:$0xff]
      %v963 = vld [vmem:[%s509 + $0x60] sm:$0xff]
      %v964 = vld [vmem:[%s509 + $0x68] sm:$0xff]
      %v965 = vld [vmem:[%s509 + $0x70] sm:$0xff]
      %v966 = vld [vmem:[%s509 + $0x78] sm:$0xff]
      %968 = vset.pattern.permute.xlu0 0
      %969 = vperm.xlu0 %968, %v845
      %v970 = vpop.permute.xlu0 %969
      %973 = vset.pattern.permute.xlu0 0
      %974 = vperm.xlu0 %973, %v852
      %v975 = vpop.permute.xlu0 %974
      %978 = vset.pattern.permute.xlu0 0
      %979 = vperm.xlu0 %978, %v859
      %v980 = vpop.permute.xlu0 %979
      %983 = vset.pattern.permute.xlu0 0
      %984 = vperm.xlu0 %983, %v866
      %v985 = vpop.permute.xlu0 %984
      %988 = vset.pattern.permute.xlu0 0
      %989 = vperm.xlu0 %988, %v873
      %v990 = vpop.permute.xlu0 %989
      %993 = vset.pattern.permute.xlu0 0
      %994 = vperm.xlu0 %993, %v880
      %v995 = vpop.permute.xlu0 %994
      %998 = vset.pattern.permute.xlu0 0
      %999 = vperm.xlu0 %998, %v887
      %v1000 = vpop.permute.xlu0 %999
      %1003 = vset.pattern.permute.xlu0 0
      %1004 = vperm.xlu0 %1003, %v894
      %v1005 = vpop.permute.xlu0 %1004
      %1008 = vset.pattern.permute.xlu0 0
      %1009 = vperm.xlu0 %1008, %v901
      %v1010 = vpop.permute.xlu0 %1009
      %1013 = vset.pattern.permute.xlu0 0
      %1014 = vperm.xlu0 %1013, %v908
      %v1015 = vpop.permute.xlu0 %1014
      %1018 = vset.pattern.permute.xlu0 0
      %1019 = vperm.xlu0 %1018, %v915
      %v1020 = vpop.permute.xlu0 %1019
      %1023 = vset.pattern.permute.xlu0 0
      %1024 = vperm.xlu0 %1023, %v922
      %v1025 = vpop.permute.xlu0 %1024
      %1028 = vset.pattern.permute.xlu0 0
      %1029 = vperm.xlu0 %1028, %v929
      %v1030 = vpop.permute.xlu0 %1029
      %1033 = vset.pattern.permute.xlu0 0
      %1034 = vperm.xlu0 %1033, %v936
      %v1035 = vpop.permute.xlu0 %1034
      %1038 = vset.pattern.permute.xlu0 0
      %1039 = vperm.xlu0 %1038, %v943
      %v1040 = vpop.permute.xlu0 %1039
      %1043 = vset.pattern.permute.xlu0 0
      %1044 = vperm.xlu0 %1043, %v950
      %v1045 = vpop.permute.xlu0 %1044
      %v1047 = vmul.f32 %v970, %v951
      %v1048 = vmul.f32 %v975, %v952
      %v1049 = vmul.f32 %v980, %v953
      %v1050 = vmul.f32 %v985, %v954
      %v1051 = vmul.f32 %v990, %v955
      %v1052 = vmul.f32 %v995, %v956
      %v1053 = vmul.f32 %v1000, %v957
      %v1054 = vmul.f32 %v1005, %v958
      %v1055 = vmul.f32 %v1010, %v959
      %v1056 = vmul.f32 %v1015, %v960
      %v1057 = vmul.f32 %v1020, %v961
      %v1058 = vmul.f32 %v1025, %v962
      %v1059 = vmul.f32 %v1030, %v963
      %v1060 = vmul.f32 %v1035, %v964
      %v1061 = vmul.f32 %v1040, %v965
      %v1062 = vmul.f32 %v1045, %v966
      %v1063 = vadd.f32 %v807, %v1047
      %v1064 = vadd.f32 %v808, %v1048
      %v1065 = vadd.f32 %v809, %v1049
      %v1066 = vadd.f32 %v810, %v1050
      %v1067 = vadd.f32 %v811, %v1051
      %v1068 = vadd.f32 %v812, %v1052
      %v1069 = vadd.f32 %v813, %v1053
      %v1070 = vadd.f32 %v814, %v1054
      %v1071 = vadd.f32 %v815, %v1055
      %v1072 = vadd.f32 %v816, %v1056
      %v1073 = vadd.f32 %v817, %v1057
      %v1074 = vadd.f32 %v818, %v1058
      %v1075 = vadd.f32 %v819, %v1059
      %v1076 = vadd.f32 %v820, %v1060
      %v1077 = vadd.f32 %v821, %v1061
      %v1078 = vadd.f32 %v822, %v1062
      %vm1079 = vcmask 261120
      %v1080 = vsel %vm1079, %v1063, -inf
      %1081 = vmax.xlane.f32.xlu0 %v1080
      %v1082 = vpop.xlane.xlu0 %1081
      %v1083 = vsel %vm1079, %v1064, -inf
      %1084 = vmax.xlane.f32.xlu0 %v1083
      %v1085 = vpop.xlane.xlu0 %1084
      %v1086 = vsel %vm1079, %v1065, -inf
      %1087 = vmax.xlane.f32.xlu0 %v1086
      %v1088 = vpop.xlane.xlu0 %1087
      %v1089 = vsel %vm1079, %v1066, -inf
      %1090 = vmax.xlane.f32.xlu0 %v1089
      %v1091 = vpop.xlane.xlu0 %1090
      %v1092 = vsel %vm1079, %v1067, -inf
      %1093 = vmax.xlane.f32.xlu0 %v1092
      %v1094 = vpop.xlane.xlu0 %1093
      %v1095 = vsel %vm1079, %v1068, -inf
      %1096 = vmax.xlane.f32.xlu0 %v1095
      %v1097 = vpop.xlane.xlu0 %1096
      %v1098 = vsel %vm1079, %v1069, -inf
      %1099 = vmax.xlane.f32.xlu0 %v1098
      %v1100 = vpop.xlane.xlu0 %1099
      %v1101 = vsel %vm1079, %v1070, -inf
      %1102 = vmax.xlane.f32.xlu0 %v1101
      %v1103 = vpop.xlane.xlu0 %1102
      %v1104 = vsel %vm1079, %v1071, -inf
      %1105 = vmax.xlane.f32.xlu0 %v1104
      %v1106 = vpop.xlane.xlu0 %1105
      %v1107 = vsel %vm1079, %v1072, -inf
      %1108 = vmax.xlane.f32.xlu0 %v1107
      %v1109 = vpop.xlane.xlu0 %1108
      %v1110 = vsel %vm1079, %v1073, -inf
      %1111 = vmax.xlane.f32.xlu0 %v1110
      %v1112 = vpop.xlane.xlu0 %1111
      %v1113 = vsel %vm1079, %v1074, -inf
      %1114 = vmax.xlane.f32.xlu0 %v1113
      %v1115 = vpop.xlane.xlu0 %1114
      %v1116 = vsel %vm1079, %v1075, -inf
      %1117 = vmax.xlane.f32.xlu0 %v1116
      %v1118 = vpop.xlane.xlu0 %1117
      %v1119 = vsel %vm1079, %v1076, -inf
      %1120 = vmax.xlane.f32.xlu0 %v1119
      %v1121 = vpop.xlane.xlu0 %1120
      %v1122 = vsel %vm1079, %v1077, -inf
      %1123 = vmax.xlane.f32.xlu0 %v1122
      %v1124 = vpop.xlane.xlu0 %1123
      %v1125 = vsel %vm1079, %v1078, -inf
      %1126 = vmax.xlane.f32.xlu0 %v1125
      %v1127 = vpop.xlane.xlu0 %1126
      %v1128 = vsub.f32 %v1063, %v1082
      %v1129 = vsub.f32 %v1064, %v1085
      %v1130 = vsub.f32 %v1065, %v1088
      %v1131 = vsub.f32 %v1066, %v1091
      %v1132 = vsub.f32 %v1067, %v1094
      %v1133 = vsub.f32 %v1068, %v1097
      %v1134 = vsub.f32 %v1069, %v1100
      %v1135 = vsub.f32 %v1070, %v1103
      %v1136 = vsub.f32 %v1071, %v1106
      %v1137 = vsub.f32 %v1072, %v1109
      %v1138 = vsub.f32 %v1073, %v1112
      %v1139 = vsub.f32 %v1074, %v1115
      %v1140 = vsub.f32 %v1075, %v1118
      %v1141 = vsub.f32 %v1076, %v1121
      %v1142 = vsub.f32 %v1077, %v1124
      %v1143 = vsub.f32 %v1078, %v1127
      %v1144 = vmul.f32 %v1128, 1.442695
      %v1145 = vpow.pop %v1144
      %v1146 = vmul.f32 %v1129, 1.442695
      %v1147 = vpow.pop %v1146
      %v1148 = vmul.f32 %v1130, 1.442695
      %v1149 = vpow.pop %v1148
      %v1150 = vmul.f32 %v1131, 1.442695
      %v1151 = vpow.pop %v1150
      %v1152 = vmul.f32 %v1132, 1.442695
      %v1153 = vpow.pop %v1152
      %v1154 = vmul.f32 %v1133, 1.442695
      %v1155 = vpow.pop %v1154
      %v1156 = vmul.f32 %v1134, 1.442695
      %v1157 = vpow.pop %v1156
      %v1158 = vmul.f32 %v1135, 1.442695
      %v1159 = vpow.pop %v1158
      %v1160 = vmul.f32 %v1136, 1.442695
      %v1161 = vpow.pop %v1160
      %v1162 = vmul.f32 %v1137, 1.442695
      %v1163 = vpow.pop %v1162
      %v1164 = vmul.f32 %v1138, 1.442695
      %v1165 = vpow.pop %v1164
      %v1166 = vmul.f32 %v1139, 1.442695
      %v1167 = vpow.pop %v1166
      %v1168 = vmul.f32 %v1140, 1.442695
      %v1169 = vpow.pop %v1168
      %v1170 = vmul.f32 %v1141, 1.442695
      %v1171 = vpow.pop %v1170
      %v1172 = vmul.f32 %v1142, 1.442695
      %v1173 = vpow.pop %v1172
      %v1174 = vmul.f32 %v1143, 1.442695
      %v1175 = vpow.pop %v1174
      %v1176 = vsel %vm1079, %v1145, 0.0
      %1177 = vadd.xlane.f32.xlu0 %v1176
      %v1178 = vpop.xlane.xlu0 %1177
      %v1179 = vsel %vm1079, %v1147, 0.0
      %1180 = vadd.xlane.f32.xlu0 %v1179
      %v1181 = vpop.xlane.xlu0 %1180
      %v1182 = vsel %vm1079, %v1149, 0.0
      %1183 = vadd.xlane.f32.xlu0 %v1182
      %v1184 = vpop.xlane.xlu0 %1183
      %v1185 = vsel %vm1079, %v1151, 0.0
      %1186 = vadd.xlane.f32.xlu0 %v1185
      %v1187 = vpop.xlane.xlu0 %1186
      %v1188 = vsel %vm1079, %v1153, 0.0
      %1189 = vadd.xlane.f32.xlu0 %v1188
      %v1190 = vpop.xlane.xlu0 %1189
      %v1191 = vsel %vm1079, %v1155, 0.0
      %1192 = vadd.xlane.f32.xlu0 %v1191
      %v1193 = vpop.xlane.xlu0 %1192
      %v1194 = vsel %vm1079, %v1157, 0.0
      %1195 = vadd.xlane.f32.xlu0 %v1194
      %v1196 = vpop.xlane.xlu0 %1195
      %v1197 = vsel %vm1079, %v1159, 0.0
      %1198 = vadd.xlane.f32.xlu0 %v1197
      %v1199 = vpop.xlane.xlu0 %1198
      %v1200 = vsel %vm1079, %v1161, 0.0
      %1201 = vadd.xlane.f32.xlu0 %v1200
      %v1202 = vpop.xlane.xlu0 %1201
      %v1203 = vsel %vm1079, %v1163, 0.0
      %1204 = vadd.xlane.f32.xlu0 %v1203
      %v1205 = vpop.xlane.xlu0 %1204
      %v1206 = vsel %vm1079, %v1165, 0.0
      %1207 = vadd.xlane.f32.xlu0 %v1206
      %v1208 = vpop.xlane.xlu0 %1207
      %v1209 = vsel %vm1079, %v1167, 0.0
      %1210 = vadd.xlane.f32.xlu0 %v1209
      %v1211 = vpop.xlane.xlu0 %1210
      %v1212 = vsel %vm1079, %v1169, 0.0
      %1213 = vadd.xlane.f32.xlu0 %v1212
      %v1214 = vpop.xlane.xlu0 %1213
      %v1215 = vsel %vm1079, %v1171, 0.0
      %1216 = vadd.xlane.f32.xlu0 %v1215
      %v1217 = vpop.xlane.xlu0 %1216
      %v1218 = vsel %vm1079, %v1173, 0.0
      %1219 = vadd.xlane.f32.xlu0 %v1218
      %v1220 = vpop.xlane.xlu0 %1219
      %v1221 = vsel %vm1079, %v1175, 0.0
      %1222 = vadd.xlane.f32.xlu0 %v1221
      %v1223 = vpop.xlane.xlu0 %1222
      %v1224 = vrcp.pop %v1178
      %v1225 = vmul.f32 %v1145, %v1224
      %v1226 = vrcp.pop %v1181
      %v1227 = vmul.f32 %v1147, %v1226
      %v1228 = vrcp.pop %v1184
      %v1229 = vmul.f32 %v1149, %v1228
      %v1230 = vrcp.pop %v1187
      %v1231 = vmul.f32 %v1151, %v1230
      %v1232 = vrcp.pop %v1190
      %v1233 = vmul.f32 %v1153, %v1232
      %v1234 = vrcp.pop %v1193
      %v1235 = vmul.f32 %v1155, %v1234
      %v1236 = vrcp.pop %v1196
      %v1237 = vmul.f32 %v1157, %v1236
      %v1238 = vrcp.pop %v1199
      %v1239 = vmul.f32 %v1159, %v1238
      %v1240 = vrcp.pop %v1202
      %v1241 = vmul.f32 %v1161, %v1240
      %v1242 = vrcp.pop %v1205
      %v1243 = vmul.f32 %v1163, %v1242
      %v1244 = vrcp.pop %v1208
      %v1245 = vmul.f32 %v1165, %v1244
      %v1246 = vrcp.pop %v1211
      %v1247 = vmul.f32 %v1167, %v1246
      %v1248 = vrcp.pop %v1214
      %v1249 = vmul.f32 %v1169, %v1248
      %v1250 = vrcp.pop %v1217
      %v1251 = vmul.f32 %v1171, %v1250
      %v1252 = vrcp.pop %v1220
      %v1253 = vmul.f32 %v1173, %v1252
      %v1254 = vrcp.pop %v1223
      %v1255 = vmul.f32 %v1175, %v1254
      %v1256 = vmul.f32 %v1225, 2.0
      %v1257 = vmul.f32 %v1227, 2.0
      %v1258 = vmul.f32 %v1229, 2.0
      %v1259 = vmul.f32 %v1231, 2.0
      %v1260 = vmul.f32 %v1233, 2.0
      %v1261 = vmul.f32 %v1235, 2.0
      %v1262 = vmul.f32 %v1237, 2.0
      %v1263 = vmul.f32 %v1239, 2.0
      %v1264 = vmul.f32 %v1241, 2.0
      %v1265 = vmul.f32 %v1243, 2.0
      %v1266 = vmul.f32 %v1245, 2.0
      %v1267 = vmul.f32 %v1247, 2.0
      %v1268 = vmul.f32 %v1249, 2.0
      %v1269 = vmul.f32 %v1251, 2.0
      %v1270 = vmul.f32 %v1253, 2.0
      %v1271 = vmul.f32 %v1255, 2.0
      %v1272 = vsub.f32 %v1256, 1.0
      %v1273 = vsub.f32 %v1257, 1.0
      %v1274 = vsub.f32 %v1258, 1.0
      %v1275 = vsub.f32 %v1259, 1.0
      %v1276 = vsub.f32 %v1260, 1.0
      %v1277 = vsub.f32 %v1261, 1.0
      %v1278 = vsub.f32 %v1262, 1.0
      %v1279 = vsub.f32 %v1263, 1.0
      %v1280 = vsub.f32 %v1264, 1.0
      %v1281 = vsub.f32 %v1265, 1.0
      %v1282 = vsub.f32 %v1266, 1.0
      %v1283 = vsub.f32 %v1267, 1.0
      %v1284 = vsub.f32 %v1268, 1.0
      %v1285 = vsub.f32 %v1269, 1.0
      %v1286 = vsub.f32 %v1270, 1.0
      %v1287 = vsub.f32 %v1271, 1.0
      %v1288 = vpack.c.bf16 %v1273, %v1272
      %v1289 = vpack.c.bf16 %v1275, %v1274
      %v1290 = vpack.c.bf16 %v1277, %v1276
      %v1291 = vpack.c.bf16 %v1279, %v1278
      %v1292 = vpack.c.bf16 %v1281, %v1280
      %v1293 = vpack.c.bf16 %v1283, %v1282
      %v1294 = vpack.c.bf16 %v1285, %v1284
      %v1295 = vpack.c.bf16 %v1287, %v1286
      %v1296 = vld [vmem:[%s4] sm:$0xf]
      %v1297 = vld [vmem:[%s4 + $0x4] sm:$0xf]
      %v1298 = vld [vmem:[%s4 + $0x8] sm:$0xf]
      %v1299 = vld [vmem:[%s4 + $0xc] sm:$0xf]
      %v1300 = vld [vmem:[%s5] sm:$0x1]
      %v1302 = vlaneseq
      %v1303 = vshrl.u32 %v1302, 7
      %v1304 = vsub.s32 0, %v1303
      %v1305 = vrot.slane %v1300, %v1304
      %v1311 = vunpack.c.l.b16 %v1296
      %v1312 = vunpack.c.l.b16 %v1297
      %v1313 = vunpack.c.l.b16 %v1298
      %v1314 = vunpack.c.l.b16 %v1299
      %v1315 = vpack.c.b16 %v1312, %v1311
      %v1316 = vpack.c.b16 %v1314, %v1313
      %v1320 = vsel %vm1079, %v1288, 0
      %v1323 = vsel %vm1079, %v1289, 0
      %v1326 = vsel %vm1079, %v1290, 0
      %v1329 = vsel %vm1079, %v1291, 0
      %v1332 = vsel %vm1079, %v1292, 0
      %v1335 = vsel %vm1079, %v1293, 0
      %v1338 = vsel %vm1079, %v1294, 0
      %v1341 = vsel %vm1079, %v1295, 0
      %1343 = vmatprep.subr.bf16.mxu0 0
      %1344 = vmatpush1.bf16.msra.mxu0 0
      %1345 = vmatprep.subr.bf16.mxu0 0
      %1346 = vmatpush1.bf16.msra.mxu0 0
      %1347 = vmatprep.subr.bf16.mxu0 0
      %1348 = vmatpush1.bf16.msra.mxu0 0
      %1349 = vmatprep.subr.bf16.mxu0 0
      %1350 = vmatpush1.bf16.msra.mxu0 0
      %1351 = vmatprep.subr.bf16.mxu0 0
      %1352 = vmatpush1.bf16.msra.mxu0 0
      %1353 = vmatprep.subr.bf16.mxu0 0
      %1354 = vmatpush1.bf16.msra.mxu0 0
      %1355 = vmatprep.subr.bf16.mxu0 0
      %1356 = vmatpush1.bf16.msra.mxu0 %v1316
      %1357 = vmatprep.subr.bf16.mxu0 0
      %1358 = vmatpush1.bf16.msra.mxu0 %v1315
      %1359 = vmatprep.subr.bf16.mxu0 0
      %1360 = vmatpush2.bf16.msra.mxu0 0
      %1361 = vmatprep.subr.bf16.mxu0 0
      %1362 = vmatpush2.bf16.msra.mxu0 0
      %1363 = vmatprep.subr.bf16.mxu0 0
      %1364 = vmatpush2.bf16.msra.mxu0 0
      %1365 = vmatprep.subr.bf16.mxu0 0
      %1366 = vmatpush2.bf16.msra.mxu0 0
      %1367 = vmatprep.subr.bf16.mxu0 0
      %1368 = vmatpush2.bf16.msra.mxu0 0
      %1369 = vmatprep.subr.bf16.mxu0 0
      %1370 = vmatpush2.bf16.msra.mxu0 0
      %1371 = vmatprep.subr.bf16.mxu0 0
      %1372 = vmatpush2.bf16.msra.mxu0 0
      %1373 = vmatprep.subr.bf16.mxu0 0
      %1374 = vmatpush2.bf16.msra.mxu0 0
      %1375 = vmatprep.mubr.bf16.mxu0 0
      %1376 = vmatmul.mubr.bf16.gmra.mxu0 %v1320
      %v1377 = vpop.f32.mrf.mxu0
      %v1378 = vadd.f32 %v1305, %v1377
      %v1379 = vpop.f32.mrf.mxu0
      %v1380 = vpop.f32.mrf.mxu0
      %v1381 = vadd.f32 %v1305, %v1380
      %v1382 = vpop.f32.mrf.mxu0
      %1383 = vmatprep.mubr.bf16.mxu0 0
      %1384 = vmatmul.mubr.bf16.gmra.mxu0 %v1323
      %v1385 = vpop.f32.mrf.mxu0
      %v1386 = vadd.f32 %v1305, %v1385
      %v1387 = vpop.f32.mrf.mxu0
      %v1388 = vpop.f32.mrf.mxu0
      %v1389 = vadd.f32 %v1305, %v1388
      %v1390 = vpop.f32.mrf.mxu0
      %1391 = vmatprep.mubr.bf16.mxu0 0
      %1392 = vmatmul.mubr.bf16.gmra.mxu0 %v1326
      %v1393 = vpop.f32.mrf.mxu0
      %v1394 = vadd.f32 %v1305, %v1393
      %v1395 = vpop.f32.mrf.mxu0
      %v1396 = vpop.f32.mrf.mxu0
      %v1397 = vadd.f32 %v1305, %v1396
      %v1398 = vpop.f32.mrf.mxu0
      %1399 = vmatprep.mubr.bf16.mxu0 0
      %1400 = vmatmul.mubr.bf16.gmra.mxu0 %v1329
      %v1401 = vpop.f32.mrf.mxu0
      %v1402 = vadd.f32 %v1305, %v1401
      %v1403 = vpop.f32.mrf.mxu0
      %v1404 = vpop.f32.mrf.mxu0
      %v1405 = vadd.f32 %v1305, %v1404
      %v1406 = vpop.f32.mrf.mxu0
      %1407 = vmatprep.mubr.bf16.mxu0 0
      %1408 = vmatmul.mubr.bf16.gmra.mxu0 %v1332
      %v1409 = vpop.f32.mrf.mxu0
      %v1410 = vadd.f32 %v1305, %v1409
      %v1411 = vpop.f32.mrf.mxu0
      %v1412 = vpop.f32.mrf.mxu0
      %v1413 = vadd.f32 %v1305, %v1412
      %v1414 = vpop.f32.mrf.mxu0
      %1415 = vmatprep.mubr.bf16.mxu0 0
      %1416 = vmatmul.mubr.bf16.gmra.mxu0 %v1335
      %v1417 = vpop.f32.mrf.mxu0
      %v1418 = vadd.f32 %v1305, %v1417
      %v1419 = vpop.f32.mrf.mxu0
      %v1420 = vpop.f32.mrf.mxu0
      %v1421 = vadd.f32 %v1305, %v1420
      %v1422 = vpop.f32.mrf.mxu0
      %1423 = vmatprep.mubr.bf16.mxu0 0
      %1424 = vmatmul.mubr.bf16.gmra.mxu0 %v1338
      %v1425 = vpop.f32.mrf.mxu0
      %v1426 = vadd.f32 %v1305, %v1425
      %v1427 = vpop.f32.mrf.mxu0
      %v1428 = vpop.f32.mrf.mxu0
      %v1429 = vadd.f32 %v1305, %v1428
      %v1430 = vpop.f32.mrf.mxu0
      %1431 = vmatprep.mubr.bf16.mxu0 0
      %1432 = vmatmul.mubr.bf16.gmra.mxu0 %v1341
      %v1433 = vpop.f32.mrf.mxu0
      %v1434 = vadd.f32 %v1305, %v1433
      %v1435 = vpop.f32.mrf.mxu0
      %v1436 = vpop.f32.mrf.mxu0
      %v1437 = vadd.f32 %v1305, %v1436
      %v1438 = vpop.f32.mrf.mxu0
      %1439 = vdwg.mxu0
      %v1440 = vld [vmem:[%s6] sm:$0x1]
      %1442 = vset.pattern.permute.xlu0 0
      %1443 = vperm.xlu0 %1442, %v647
      %v1444 = vpop.permute.xlu0 %1443
      %1447 = vset.pattern.permute.xlu0 0
      %1448 = vperm.xlu0 %1447, %v648
      %v1449 = vpop.permute.xlu0 %1448
      %1452 = vset.pattern.permute.xlu0 0
      %1453 = vperm.xlu0 %1452, %v649
      %v1454 = vpop.permute.xlu0 %1453
      %1457 = vset.pattern.permute.xlu0 0
      %1458 = vperm.xlu0 %1457, %v650
      %v1459 = vpop.permute.xlu0 %1458
      %1462 = vset.pattern.permute.xlu0 0
      %1463 = vperm.xlu0 %1462, %v651
      %v1464 = vpop.permute.xlu0 %1463
      %1467 = vset.pattern.permute.xlu0 0
      %1468 = vperm.xlu0 %1467, %v652
      %v1469 = vpop.permute.xlu0 %1468
      %1472 = vset.pattern.permute.xlu0 0
      %1473 = vperm.xlu0 %1472, %v653
      %v1474 = vpop.permute.xlu0 %1473
      %1477 = vset.pattern.permute.xlu0 0
      %1478 = vperm.xlu0 %1477, %v654
      %v1479 = vpop.permute.xlu0 %1478
      %1482 = vset.pattern.permute.xlu0 0
      %1483 = vperm.xlu0 %1482, %v655
      %v1484 = vpop.permute.xlu0 %1483
      %1487 = vset.pattern.permute.xlu0 0
      %1488 = vperm.xlu0 %1487, %v656
      %v1489 = vpop.permute.xlu0 %1488
      %1492 = vset.pattern.permute.xlu0 0
      %1493 = vperm.xlu0 %1492, %v657
      %v1494 = vpop.permute.xlu0 %1493
      %1497 = vset.pattern.permute.xlu0 0
      %1498 = vperm.xlu0 %1497, %v658
      %v1499 = vpop.permute.xlu0 %1498
      %1502 = vset.pattern.permute.xlu0 0
      %1503 = vperm.xlu0 %1502, %v659
      %v1504 = vpop.permute.xlu0 %1503
      %1507 = vset.pattern.permute.xlu0 0
      %1508 = vperm.xlu0 %1507, %v660
      %v1509 = vpop.permute.xlu0 %1508
      %1512 = vset.pattern.permute.xlu0 0
      %1513 = vperm.xlu0 %1512, %v661
      %v1514 = vpop.permute.xlu0 %1513
      %1517 = vset.pattern.permute.xlu0 0
      %1518 = vperm.xlu0 %1517, %v662
      %v1519 = vpop.permute.xlu0 %1518
      %v1522 = vlaneseq
      %v1523 = vshrl.u32 %v1522, 7
      %v1524 = vsub.s32 0, %v1523
      %v1525 = vrot.slane %v1440, %v1524
      %v1527 = vmul.f32 %v1444, %v1525
      %v1528 = vmul.f32 %v1449, %v1525
      %v1529 = vmul.f32 %v1454, %v1525
      %v1530 = vmul.f32 %v1459, %v1525
      %v1531 = vmul.f32 %v1464, %v1525
      %v1532 = vmul.f32 %v1469, %v1525
      %v1533 = vmul.f32 %v1474, %v1525
      %v1534 = vmul.f32 %v1479, %v1525
      %v1535 = vmul.f32 %v1484, %v1525
      %v1536 = vmul.f32 %v1489, %v1525
      %v1537 = vmul.f32 %v1494, %v1525
      %v1538 = vmul.f32 %v1499, %v1525
      %v1539 = vmul.f32 %v1504, %v1525
      %v1540 = vmul.f32 %v1509, %v1525
      %v1541 = vmul.f32 %v1514, %v1525
      %v1542 = vmul.f32 %v1519, %v1525
      %v1543 = vadd.f32 %v1378, %v1527
      %v1544 = vadd.f32 %v1381, %v1528
      %v1545 = vadd.f32 %v1386, %v1529
      %v1546 = vadd.f32 %v1389, %v1530
      %v1547 = vadd.f32 %v1394, %v1531
      %v1548 = vadd.f32 %v1397, %v1532
      %v1549 = vadd.f32 %v1402, %v1533
      %v1550 = vadd.f32 %v1405, %v1534
      %v1551 = vadd.f32 %v1410, %v1535
      %v1552 = vadd.f32 %v1413, %v1536
      %v1553 = vadd.f32 %v1418, %v1537
      %v1554 = vadd.f32 %v1421, %v1538
      %v1555 = vadd.f32 %v1426, %v1539
      %v1556 = vadd.f32 %v1429, %v1540
      %v1557 = vadd.f32 %v1434, %v1541
      %v1558 = vadd.f32 %v1437, %v1542
      %v1559 = vld [vmem:[%s515] sm:$0xff]
      %v1560 = vld [vmem:[%s515 + $0x8] sm:$0xff]
      %v1563 = vcombine.high %v1559, %v1559
      %v1565 = vunpack.c.l.s4 1966171168
      %v1566 = vunpack.c.0.s8 %v1565
      %v1567 = vlaneseq
      %v1568 = vshrl.u32 %v1567, 7
      %v1569 = vsub.s32 %v1566, %v1568
      %v1570 = vrot.slane %v1559, %v1569
      %v1572 = vunpack.c.l.s4 1966171168
      %v1573 = vunpack.c.0.s8 %v1572
      %v1574 = vlaneseq
      %v1575 = vshrl.u32 %v1574, 7
      %v1576 = vsub.s32 %v1573, %v1575
      %v1577 = vrot.slane %v1563, %v1576
      %v1578 = vcombine.high %v1570, %v1570
      %v1579 = vcombine.high %v1577, %v1577
      %v1581 = vunpack.c.l.s4 1966171168
      %v1582 = vunpack.c.0.s8 %v1581
      %v1583 = vlaneseq
      %v1584 = vshrl.u32 %v1583, 7
      %v1585 = vsub.s32 %v1582, %v1584
      %v1586 = vrot.slane %v1570, %v1585
      %v1588 = vunpack.c.l.s4 1966171168
      %v1589 = vunpack.c.0.s8 %v1588
      %v1590 = vlaneseq
      %v1591 = vshrl.u32 %v1590, 7
      %v1592 = vsub.s32 %v1589, %v1591
      %v1593 = vrot.slane %v1577, %v1592
      %v1595 = vunpack.c.l.s4 1966171168
      %v1596 = vunpack.c.0.s8 %v1595
      %v1597 = vlaneseq
      %v1598 = vshrl.u32 %v1597, 7
      %v1599 = vsub.s32 %v1596, %v1598
      %v1600 = vrot.slane %v1578, %v1599
      %v1602 = vunpack.c.l.s4 1966171168
      %v1603 = vunpack.c.0.s8 %v1602
      %v1604 = vlaneseq
      %v1605 = vshrl.u32 %v1604, 7
      %v1606 = vsub.s32 %v1603, %v1605
      %v1607 = vrot.slane %v1579, %v1606
      %v1608 = vcombine.high %v1586, %v1586
      %v1609 = vcombine.high %v1593, %v1593
      %v1610 = vcombine.high %v1600, %v1600
      %v1611 = vcombine.high %v1607, %v1607
      %v1612 = vcombine.high %v1560, %v1560
      %v1614 = vunpack.c.l.s4 1966171168
      %v1615 = vunpack.c.0.s8 %v1614
      %v1616 = vlaneseq
      %v1617 = vshrl.u32 %v1616, 7
      %v1618 = vsub.s32 %v1615, %v1617
      %v1619 = vrot.slane %v1560, %v1618
      %v1621 = vunpack.c.l.s4 1966171168
      %v1622 = vunpack.c.0.s8 %v1621
      %v1623 = vlaneseq
      %v1624 = vshrl.u32 %v1623, 7
      %v1625 = vsub.s32 %v1622, %v1624
      %v1626 = vrot.slane %v1612, %v1625
      %v1627 = vcombine.high %v1619, %v1619
      %v1628 = vcombine.high %v1626, %v1626
      %v1630 = vunpack.c.l.s4 1966171168
      %v1631 = vunpack.c.0.s8 %v1630
      %v1632 = vlaneseq
      %v1633 = vshrl.u32 %v1632, 7
      %v1634 = vsub.s32 %v1631, %v1633
      %v1635 = vrot.slane %v1619, %v1634
      %v1637 = vunpack.c.l.s4 1966171168
      %v1638 = vunpack.c.0.s8 %v1637
      %v1639 = vlaneseq
      %v1640 = vshrl.u32 %v1639, 7
      %v1641 = vsub.s32 %v1638, %v1640
      %v1642 = vrot.slane %v1626, %v1641
      %v1644 = vunpack.c.l.s4 1966171168
      %v1645 = vunpack.c.0.s8 %v1644
      %v1646 = vlaneseq
      %v1647 = vshrl.u32 %v1646, 7
      %v1648 = vsub.s32 %v1645, %v1647
      %v1649 = vrot.slane %v1627, %v1648
      %v1651 = vunpack.c.l.s4 1966171168
      %v1652 = vunpack.c.0.s8 %v1651
      %v1653 = vlaneseq
      %v1654 = vshrl.u32 %v1653, 7
      %v1655 = vsub.s32 %v1652, %v1654
      %v1656 = vrot.slane %v1628, %v1655
      %v1657 = vcombine.high %v1635, %v1635
      %v1658 = vcombine.high %v1642, %v1642
      %v1659 = vcombine.high %v1649, %v1649
      %v1660 = vcombine.high %v1656, %v1656
      %v1661 = vlaneseq
      %v1662 = vshrl.u32 %v1661, 7
      %v1663 = vsub.s32 0, %v1662
      %v1664 = vrot.slane %v1586, %v1663
      %v1665 = vlaneseq
      %v1666 = vshrl.u32 %v1665, 7
      %v1667 = vsub.s32 0, %v1666
      %v1668 = vrot.slane %v1600, %v1667
      %v1669 = vlaneseq
      %v1670 = vshrl.u32 %v1669, 7
      %v1671 = vsub.s32 0, %v1670
      %v1672 = vrot.slane %v1608, %v1671
      %v1673 = vlaneseq
      %v1674 = vshrl.u32 %v1673, 7
      %v1675 = vsub.s32 0, %v1674
      %v1676 = vrot.slane %v1610, %v1675
      %v1677 = vlaneseq
      %v1678 = vshrl.u32 %v1677, 7
      %v1679 = vsub.s32 0, %v1678
      %v1680 = vrot.slane %v1593, %v1679
      %v1681 = vlaneseq
      %v1682 = vshrl.u32 %v1681, 7
      %v1683 = vsub.s32 0, %v1682
      %v1684 = vrot.slane %v1607, %v1683
      %v1685 = vlaneseq
      %v1686 = vshrl.u32 %v1685, 7
      %v1687 = vsub.s32 0, %v1686
      %v1688 = vrot.slane %v1609, %v1687
      %v1689 = vlaneseq
      %v1690 = vshrl.u32 %v1689, 7
      %v1691 = vsub.s32 0, %v1690
      %v1692 = vrot.slane %v1611, %v1691
      %v1693 = vlaneseq
      %v1694 = vshrl.u32 %v1693, 7
      %v1695 = vsub.s32 0, %v1694
      %v1696 = vrot.slane %v1635, %v1695
      %v1697 = vlaneseq
      %v1698 = vshrl.u32 %v1697, 7
      %v1699 = vsub.s32 0, %v1698
      %v1700 = vrot.slane %v1649, %v1699
      %v1701 = vlaneseq
      %v1702 = vshrl.u32 %v1701, 7
      %v1703 = vsub.s32 0, %v1702
      %v1704 = vrot.slane %v1657, %v1703
      %v1705 = vlaneseq
      %v1706 = vshrl.u32 %v1705, 7
      %v1707 = vsub.s32 0, %v1706
      %v1708 = vrot.slane %v1659, %v1707
      %v1709 = vlaneseq
      %v1710 = vshrl.u32 %v1709, 7
      %v1711 = vsub.s32 0, %v1710
      %v1712 = vrot.slane %v1642, %v1711
      %v1713 = vlaneseq
      %v1714 = vshrl.u32 %v1713, 7
      %v1715 = vsub.s32 0, %v1714
      %v1716 = vrot.slane %v1656, %v1715
      %v1717 = vlaneseq
      %v1718 = vshrl.u32 %v1717, 7
      %v1719 = vsub.s32 0, %v1718
      %v1720 = vrot.slane %v1658, %v1719
      %v1721 = vlaneseq
      %v1722 = vshrl.u32 %v1721, 7
      %v1723 = vsub.s32 0, %v1722
      %v1724 = vrot.slane %v1660, %v1723
      %v1741 = vadd.f32 %v1543, %v1664
      %v1742 = vadd.f32 %v1544, %v1668
      %v1743 = vadd.f32 %v1545, %v1672
      %v1744 = vadd.f32 %v1546, %v1676
      %v1745 = vadd.f32 %v1547, %v1680
      %v1746 = vadd.f32 %v1548, %v1684
      %v1747 = vadd.f32 %v1549, %v1688
      %v1748 = vadd.f32 %v1550, %v1692
      %v1749 = vadd.f32 %v1551, %v1696
      %v1750 = vadd.f32 %v1552, %v1700
      %v1751 = vadd.f32 %v1553, %v1704
      %v1752 = vadd.f32 %v1554, %v1708
      %v1753 = vadd.f32 %v1555, %v1712
      %v1754 = vadd.f32 %v1556, %v1716
      %v1755 = vadd.f32 %v1557, %v1720
      %v1756 = vadd.f32 %v1558, %v1724
      %v1757 = vmax.f32 %v1741, 0.0
      %v1758 = vmax.f32 %v1742, 0.0
      %v1759 = vmax.f32 %v1743, 0.0
      %v1760 = vmax.f32 %v1744, 0.0
      %v1761 = vmax.f32 %v1745, 0.0
      %v1762 = vmax.f32 %v1746, 0.0
      %v1763 = vmax.f32 %v1747, 0.0
      %v1764 = vmax.f32 %v1748, 0.0
      %v1765 = vmax.f32 %v1749, 0.0
      %v1766 = vmax.f32 %v1750, 0.0
      %v1767 = vmax.f32 %v1751, 0.0
      %v1768 = vmax.f32 %v1752, 0.0
      %v1769 = vmax.f32 %v1753, 0.0
      %v1770 = vmax.f32 %v1754, 0.0
      %v1771 = vmax.f32 %v1755, 0.0
      %v1772 = vmax.f32 %v1756, 0.0
      %v1773 = vpack.c.bf16 %v1758, %v1757
      %v1774 = vpack.c.bf16 %v1760, %v1759
      %v1775 = vpack.c.bf16 %v1762, %v1761
      %v1776 = vpack.c.bf16 %v1764, %v1763
      %v1777 = vpack.c.bf16 %v1766, %v1765
      %v1778 = vpack.c.bf16 %v1768, %v1767
      %v1779 = vpack.c.bf16 %v1770, %v1769
      %v1780 = vpack.c.bf16 %v1772, %v1771
      %v1781 = vld [vmem:[%s7] sm:$0xf]
      %v1782 = vld [vmem:[%s7 + $0x4] sm:$0xf]
      %v1783 = vld [vmem:[%s7 + $0x8] sm:$0xf]
      %v1784 = vld [vmem:[%s7 + $0xc] sm:$0xf]
      %v1785 = vld [vmem:[%s7 + $0x10] sm:$0xf]
      %v1786 = vld [vmem:[%s7 + $0x14] sm:$0xf]
      %v1787 = vld [vmem:[%s8] sm:$0x1]
      %v1789 = vlaneseq
      %v1790 = vshrl.u32 %v1789, 7
      %v1791 = vsub.s32 0, %v1790
      %v1792 = vrot.slane %v1787, %v1791
      %v1800 = vunpack.c.l.b16 %v1781
      %v1801 = vunpack.c.l.b16 %v1782
      %v1802 = vunpack.c.l.b16 %v1783
      %v1803 = vunpack.c.l.b16 %v1784
      %v1804 = vunpack.c.l.b16 %v1785
      %v1805 = vunpack.c.l.b16 %v1786
      %v1806 = vpack.c.b16 %v1801, %v1800
      %v1807 = vpack.c.b16 %v1803, %v1802
      %v1808 = vpack.c.b16 %v1805, %v1804
      %vm1812 = vcmask 392192
      %v1814 = vsel %vm1812, %v1773, 0
      %v1817 = vsel %vm1812, %v1774, 0
      %v1820 = vsel %vm1812, %v1775, 0
      %v1823 = vsel %vm1812, %v1776, 0
      %v1826 = vsel %vm1812, %v1777, 0
      %v1829 = vsel %vm1812, %v1778, 0
      %v1832 = vsel %vm1812, %v1779, 0
      %v1835 = vsel %vm1812, %v1780, 0
      %1837 = vmatprep.subr.bf16.mxu0 0
      %1838 = vmatpush1.bf16.msra.mxu0 0
      %1839 = vmatprep.subr.bf16.mxu0 0
      %1840 = vmatpush1.bf16.msra.mxu0 0
      %1841 = vmatprep.subr.bf16.mxu0 0
      %1842 = vmatpush1.bf16.msra.mxu0 0
      %1843 = vmatprep.subr.bf16.mxu0 0
      %1844 = vmatpush1.bf16.msra.mxu0 0
      %1845 = vmatprep.subr.bf16.mxu0 0
      %1846 = vmatpush1.bf16.msra.mxu0 0
      %1847 = vmatprep.subr.bf16.mxu0 0
      %1848 = vmatpush1.bf16.msra.mxu0 %v1808
      %1849 = vmatprep.subr.bf16.mxu0 0
      %1850 = vmatpush1.bf16.msra.mxu0 %v1807
      %1851 = vmatprep.subr.bf16.mxu0 0
      %1852 = vmatpush1.bf16.msra.mxu0 %v1806
      %1853 = vmatprep.subr.bf16.mxu0 0
      %1854 = vmatpush2.bf16.msra.mxu0 0
      %1855 = vmatprep.subr.bf16.mxu0 0
      %1856 = vmatpush2.bf16.msra.mxu0 0
      %1857 = vmatprep.subr.bf16.mxu0 0
      %1858 = vmatpush2.bf16.msra.mxu0 0
      %1859 = vmatprep.subr.bf16.mxu0 0
      %1860 = vmatpush2.bf16.msra.mxu0 0
      %1861 = vmatprep.subr.bf16.mxu0 0
      %1862 = vmatpush2.bf16.msra.mxu0 0
      %1863 = vmatprep.subr.bf16.mxu0 0
      %1864 = vmatpush2.bf16.msra.mxu0 0
      %1865 = vmatprep.subr.bf16.mxu0 0
      %1866 = vmatpush2.bf16.msra.mxu0 0
      %1867 = vmatprep.subr.bf16.mxu0 0
      %1868 = vmatpush2.bf16.msra.mxu0 0
      %1869 = vmatprep.mubr.bf16.mxu0 0
      %1870 = vmatmul.mubr.bf16.gmra.mxu0 %v1814
      %v1871 = vpop.f32.mrf.mxu0
      %v1872 = vadd.f32 %v1792, %v1871
      %v1873 = vpop.f32.mrf.mxu0
      %v1874 = vpop.f32.mrf.mxu0
      %v1875 = vadd.f32 %v1792, %v1874
      %v1876 = vpop.f32.mrf.mxu0
      %1877 = vmatprep.mubr.bf16.mxu0 0
      %1878 = vmatmul.mubr.bf16.gmra.mxu0 %v1817
      %v1879 = vpop.f32.mrf.mxu0
      %v1880 = vadd.f32 %v1792, %v1879
      %v1881 = vpop.f32.mrf.mxu0
      %v1882 = vpop.f32.mrf.mxu0
      %v1883 = vadd.f32 %v1792, %v1882
      %v1884 = vpop.f32.mrf.mxu0
      %1885 = vmatprep.mubr.bf16.mxu0 0
      %1886 = vmatmul.mubr.bf16.gmra.mxu0 %v1820
      %v1887 = vpop.f32.mrf.mxu0
      %v1888 = vadd.f32 %v1792, %v1887
      %v1889 = vpop.f32.mrf.mxu0
      %v1890 = vpop.f32.mrf.mxu0
      %v1891 = vadd.f32 %v1792, %v1890
      %v1892 = vpop.f32.mrf.mxu0
      %1893 = vmatprep.mubr.bf16.mxu0 0
      %1894 = vmatmul.mubr.bf16.gmra.mxu0 %v1823
      %v1895 = vpop.f32.mrf.mxu0
      %v1896 = vadd.f32 %v1792, %v1895
      %v1897 = vpop.f32.mrf.mxu0
      %v1898 = vpop.f32.mrf.mxu0
      %v1899 = vadd.f32 %v1792, %v1898
      %v1900 = vpop.f32.mrf.mxu0
      %1901 = vmatprep.mubr.bf16.mxu0 0
      %1902 = vmatmul.mubr.bf16.gmra.mxu0 %v1826
      %v1903 = vpop.f32.mrf.mxu0
      %v1904 = vadd.f32 %v1792, %v1903
      %v1905 = vpop.f32.mrf.mxu0
      %v1906 = vpop.f32.mrf.mxu0
      %v1907 = vadd.f32 %v1792, %v1906
      %v1908 = vpop.f32.mrf.mxu0
      %1909 = vmatprep.mubr.bf16.mxu0 0
      %1910 = vmatmul.mubr.bf16.gmra.mxu0 %v1829
      %v1911 = vpop.f32.mrf.mxu0
      %v1912 = vadd.f32 %v1792, %v1911
      %v1913 = vpop.f32.mrf.mxu0
      %v1914 = vpop.f32.mrf.mxu0
      %v1915 = vadd.f32 %v1792, %v1914
      %v1916 = vpop.f32.mrf.mxu0
      %1917 = vmatprep.mubr.bf16.mxu0 0
      %1918 = vmatmul.mubr.bf16.gmra.mxu0 %v1832
      %v1919 = vpop.f32.mrf.mxu0
      %v1920 = vadd.f32 %v1792, %v1919
      %v1921 = vpop.f32.mrf.mxu0
      %v1922 = vpop.f32.mrf.mxu0
      %v1923 = vadd.f32 %v1792, %v1922
      %v1924 = vpop.f32.mrf.mxu0
      %1925 = vmatprep.mubr.bf16.mxu0 0
      %1926 = vmatmul.mubr.bf16.gmra.mxu0 %v1835
      %v1927 = vpop.f32.mrf.mxu0
      %v1928 = vadd.f32 %v1792, %v1927
      %v1929 = vpop.f32.mrf.mxu0
      %v1930 = vpop.f32.mrf.mxu0
      %v1931 = vadd.f32 %v1792, %v1930
      %v1932 = vpop.f32.mrf.mxu0
      %1933 = vdwg.mxu0
      %v1934 = vsel %vm1079, %v1872, -inf
      %1935 = vmax.xlane.f32.xlu0 %v1934
      %v1936 = vpop.xlane.xlu0 %1935
      %v1937 = vsel %vm1079, %v1875, -inf
      %1938 = vmax.xlane.f32.xlu0 %v1937
      %v1939 = vpop.xlane.xlu0 %1938
      %v1940 = vsel %vm1079, %v1880, -inf
      %1941 = vmax.xlane.f32.xlu0 %v1940
      %v1942 = vpop.xlane.xlu0 %1941
      %v1943 = vsel %vm1079, %v1883, -inf
      %1944 = vmax.xlane.f32.xlu0 %v1943
      %v1945 = vpop.xlane.xlu0 %1944
      %v1946 = vsel %vm1079, %v1888, -inf
      %1947 = vmax.xlane.f32.xlu0 %v1946
      %v1948 = vpop.xlane.xlu0 %1947
      %v1949 = vsel %vm1079, %v1891, -inf
      %1950 = vmax.xlane.f32.xlu0 %v1949
      %v1951 = vpop.xlane.xlu0 %1950
      %v1952 = vsel %vm1079, %v1896, -inf
      %1953 = vmax.xlane.f32.xlu0 %v1952
      %v1954 = vpop.xlane.xlu0 %1953
      %v1955 = vsel %vm1079, %v1899, -inf
      %1956 = vmax.xlane.f32.xlu0 %v1955
      %v1957 = vpop.xlane.xlu0 %1956
      %v1958 = vsel %vm1079, %v1904, -inf
      %1959 = vmax.xlane.f32.xlu0 %v1958
      %v1960 = vpop.xlane.xlu0 %1959
      %v1961 = vsel %vm1079, %v1907, -inf
      %1962 = vmax.xlane.f32.xlu0 %v1961
      %v1963 = vpop.xlane.xlu0 %1962
      %v1964 = vsel %vm1079, %v1912, -inf
      %1965 = vmax.xlane.f32.xlu0 %v1964
      %v1966 = vpop.xlane.xlu0 %1965
      %v1967 = vsel %vm1079, %v1915, -inf
      %1968 = vmax.xlane.f32.xlu0 %v1967
      %v1969 = vpop.xlane.xlu0 %1968
      %v1970 = vsel %vm1079, %v1920, -inf
      %1971 = vmax.xlane.f32.xlu0 %v1970
      %v1972 = vpop.xlane.xlu0 %1971
      %v1973 = vsel %vm1079, %v1923, -inf
      %1974 = vmax.xlane.f32.xlu0 %v1973
      %v1975 = vpop.xlane.xlu0 %1974
      %v1976 = vsel %vm1079, %v1928, -inf
      %1977 = vmax.xlane.f32.xlu0 %v1976
      %v1978 = vpop.xlane.xlu0 %1977
      %v1979 = vsel %vm1079, %v1931, -inf
      %1980 = vmax.xlane.f32.xlu0 %v1979
      %v1981 = vpop.xlane.xlu0 %1980
      %v1982 = vsub.f32 %v1872, %v1936
      %v1983 = vsub.f32 %v1875, %v1939
      %v1984 = vsub.f32 %v1880, %v1942
      %v1985 = vsub.f32 %v1883, %v1945
      %v1986 = vsub.f32 %v1888, %v1948
      %v1987 = vsub.f32 %v1891, %v1951
      %v1988 = vsub.f32 %v1896, %v1954
      %v1989 = vsub.f32 %v1899, %v1957
      %v1990 = vsub.f32 %v1904, %v1960
      %v1991 = vsub.f32 %v1907, %v1963
      %v1992 = vsub.f32 %v1912, %v1966
      %v1993 = vsub.f32 %v1915, %v1969
      %v1994 = vsub.f32 %v1920, %v1972
      %v1995 = vsub.f32 %v1923, %v1975
      %v1996 = vsub.f32 %v1928, %v1978
      %v1997 = vsub.f32 %v1931, %v1981
      %v1998 = vmul.f32 %v1982, 1.442695
      %v1999 = vpow.pop %v1998
      %v2000 = vmul.f32 %v1983, 1.442695
      %v2001 = vpow.pop %v2000
      %v2002 = vmul.f32 %v1984, 1.442695
      %v2003 = vpow.pop %v2002
      %v2004 = vmul.f32 %v1985, 1.442695
      %v2005 = vpow.pop %v2004
      %v2006 = vmul.f32 %v1986, 1.442695
      %v2007 = vpow.pop %v2006
      %v2008 = vmul.f32 %v1987, 1.442695
      %v2009 = vpow.pop %v2008
      %v2010 = vmul.f32 %v1988, 1.442695
      %v2011 = vpow.pop %v2010
      %v2012 = vmul.f32 %v1989, 1.442695
      %v2013 = vpow.pop %v2012
      %v2014 = vmul.f32 %v1990, 1.442695
      %v2015 = vpow.pop %v2014
      %v2016 = vmul.f32 %v1991, 1.442695
      %v2017 = vpow.pop %v2016
      %v2018 = vmul.f32 %v1992, 1.442695
      %v2019 = vpow.pop %v2018
      %v2020 = vmul.f32 %v1993, 1.442695
      %v2021 = vpow.pop %v2020
      %v2022 = vmul.f32 %v1994, 1.442695
      %v2023 = vpow.pop %v2022
      %v2024 = vmul.f32 %v1995, 1.442695
      %v2025 = vpow.pop %v2024
      %v2026 = vmul.f32 %v1996, 1.442695
      %v2027 = vpow.pop %v2026
      %v2028 = vmul.f32 %v1997, 1.442695
      %v2029 = vpow.pop %v2028
      %v2030 = vsel %vm1079, %v1999, 0.0
      %2031 = vadd.xlane.f32.xlu0 %v2030
      %v2032 = vpop.xlane.xlu0 %2031
      %v2033 = vsel %vm1079, %v2001, 0.0
      %2034 = vadd.xlane.f32.xlu0 %v2033
      %v2035 = vpop.xlane.xlu0 %2034
      %v2036 = vsel %vm1079, %v2003, 0.0
      %2037 = vadd.xlane.f32.xlu0 %v2036
      %v2038 = vpop.xlane.xlu0 %2037
      %v2039 = vsel %vm1079, %v2005, 0.0
      %2040 = vadd.xlane.f32.xlu0 %v2039
      %v2041 = vpop.xlane.xlu0 %2040
      %v2042 = vsel %vm1079, %v2007, 0.0
      %2043 = vadd.xlane.f32.xlu0 %v2042
      %v2044 = vpop.xlane.xlu0 %2043
      %v2045 = vsel %vm1079, %v2009, 0.0
      %2046 = vadd.xlane.f32.xlu0 %v2045
      %v2047 = vpop.xlane.xlu0 %2046
      %v2048 = vsel %vm1079, %v2011, 0.0
      %2049 = vadd.xlane.f32.xlu0 %v2048
      %v2050 = vpop.xlane.xlu0 %2049
      %v2051 = vsel %vm1079, %v2013, 0.0
      %2052 = vadd.xlane.f32.xlu0 %v2051
      %v2053 = vpop.xlane.xlu0 %2052
      %v2054 = vsel %vm1079, %v2015, 0.0
      %2055 = vadd.xlane.f32.xlu0 %v2054
      %v2056 = vpop.xlane.xlu0 %2055
      %v2057 = vsel %vm1079, %v2017, 0.0
      %2058 = vadd.xlane.f32.xlu0 %v2057
      %v2059 = vpop.xlane.xlu0 %2058
      %v2060 = vsel %vm1079, %v2019, 0.0
      %2061 = vadd.xlane.f32.xlu0 %v2060
      %v2062 = vpop.xlane.xlu0 %2061
      %v2063 = vsel %vm1079, %v2021, 0.0
      %2064 = vadd.xlane.f32.xlu0 %v2063
      %v2065 = vpop.xlane.xlu0 %2064
      %v2066 = vsel %vm1079, %v2023, 0.0
      %2067 = vadd.xlane.f32.xlu0 %v2066
      %v2068 = vpop.xlane.xlu0 %2067
      %v2069 = vsel %vm1079, %v2025, 0.0
      %2070 = vadd.xlane.f32.xlu0 %v2069
      %v2071 = vpop.xlane.xlu0 %2070
      %v2072 = vsel %vm1079, %v2027, 0.0
      %2073 = vadd.xlane.f32.xlu0 %v2072
      %v2074 = vpop.xlane.xlu0 %2073
      %v2075 = vsel %vm1079, %v2029, 0.0
      %2076 = vadd.xlane.f32.xlu0 %v2075
      %v2077 = vpop.xlane.xlu0 %2076
      %v2078 = vrcp.pop %v2032
      %v2079 = vmul.f32 %v1999, %v2078
      %v2080 = vrcp.pop %v2035
      %v2081 = vmul.f32 %v2001, %v2080
      %v2082 = vrcp.pop %v2038
      %v2083 = vmul.f32 %v2003, %v2082
      %v2084 = vrcp.pop %v2041
      %v2085 = vmul.f32 %v2005, %v2084
      %v2086 = vrcp.pop %v2044
      %v2087 = vmul.f32 %v2007, %v2086
      %v2088 = vrcp.pop %v2047
      %v2089 = vmul.f32 %v2009, %v2088
      %v2090 = vrcp.pop %v2050
      %v2091 = vmul.f32 %v2011, %v2090
      %v2092 = vrcp.pop %v2053
      %v2093 = vmul.f32 %v2013, %v2092
      %v2094 = vrcp.pop %v2056
      %v2095 = vmul.f32 %v2015, %v2094
      %v2096 = vrcp.pop %v2059
      %v2097 = vmul.f32 %v2017, %v2096
      %v2098 = vrcp.pop %v2062
      %v2099 = vmul.f32 %v2019, %v2098
      %v2100 = vrcp.pop %v2065
      %v2101 = vmul.f32 %v2021, %v2100
      %v2102 = vrcp.pop %v2068
      %v2103 = vmul.f32 %v2023, %v2102
      %v2104 = vrcp.pop %v2071
      %v2105 = vmul.f32 %v2025, %v2104
      %v2106 = vrcp.pop %v2074
      %v2107 = vmul.f32 %v2027, %v2106
      %v2108 = vrcp.pop %v2077
      %v2109 = vmul.f32 %v2029, %v2108
      %v2110 = vsub.f32 %v631, %v2079
      %v2111 = vsub.f32 %v632, %v2081
      %v2112 = vsub.f32 %v633, %v2083
      %v2113 = vsub.f32 %v634, %v2085
      %v2114 = vsub.f32 %v635, %v2087
      %v2115 = vsub.f32 %v636, %v2089
      %v2116 = vsub.f32 %v637, %v2091
      %v2117 = vsub.f32 %v638, %v2093
      %v2118 = vsub.f32 %v639, %v2095
      %v2119 = vsub.f32 %v640, %v2097
      %v2120 = vsub.f32 %v641, %v2099
      %v2121 = vsub.f32 %v642, %v2101
      %v2122 = vsub.f32 %v643, %v2103
      %v2123 = vsub.f32 %v644, %v2105
      %v2124 = vsub.f32 %v645, %v2107
      %v2125 = vsub.f32 %v646, %v2109
      %v2126 = vmul.f32 %v2110, %v2110
      %v2127 = vmul.f32 %v2111, %v2111
      %v2128 = vmul.f32 %v2112, %v2112
      %v2129 = vmul.f32 %v2113, %v2113
      %v2130 = vmul.f32 %v2114, %v2114
      %v2131 = vmul.f32 %v2115, %v2115
      %v2132 = vmul.f32 %v2116, %v2116
      %v2133 = vmul.f32 %v2117, %v2117
      %v2134 = vmul.f32 %v2118, %v2118
      %v2135 = vmul.f32 %v2119, %v2119
      %v2136 = vmul.f32 %v2120, %v2120
      %v2137 = vmul.f32 %v2121, %v2121
      %v2138 = vmul.f32 %v2122, %v2122
      %v2139 = vmul.f32 %v2123, %v2123
      %v2140 = vmul.f32 %v2124, %v2124
      %v2141 = vmul.f32 %v2125, %v2125
      %v2142 = vmul.f32 %v647, 96.0
      %v2143 = vmul.f32 %v648, 96.0
      %v2144 = vmul.f32 %v649, 96.0
      %v2145 = vmul.f32 %v650, 96.0
      %v2146 = vmul.f32 %v651, 96.0
      %v2147 = vmul.f32 %v652, 96.0
      %v2148 = vmul.f32 %v653, 96.0
      %v2149 = vmul.f32 %v654, 96.0
      %v2150 = vmul.f32 %v655, 96.0
      %v2151 = vmul.f32 %v656, 96.0
      %v2152 = vmul.f32 %v657, 96.0
      %v2153 = vmul.f32 %v658, 96.0
      %v2154 = vmul.f32 %v659, 96.0
      %v2155 = vmul.f32 %v660, 96.0
      %v2156 = vmul.f32 %v661, 96.0
      %v2157 = vmul.f32 %v662, 96.0
      %v2158 = vsel %vm1079, %v2126, 0.0
      %2159 = vadd.xlane.f32.xlu0 %v2158
      %v2160 = vpop.xlane.xlu0 %2159
      %v2161 = vsel %vm1079, %v2127, 0.0
      %2162 = vadd.xlane.f32.xlu0 %v2161
      %v2163 = vpop.xlane.xlu0 %2162
      %v2164 = vsel %vm1079, %v2128, 0.0
      %2165 = vadd.xlane.f32.xlu0 %v2164
      %v2166 = vpop.xlane.xlu0 %2165
      %v2167 = vsel %vm1079, %v2129, 0.0
      %2168 = vadd.xlane.f32.xlu0 %v2167
      %v2169 = vpop.xlane.xlu0 %2168
      %v2170 = vsel %vm1079, %v2130, 0.0
      %2171 = vadd.xlane.f32.xlu0 %v2170
      %v2172 = vpop.xlane.xlu0 %2171
      %v2173 = vsel %vm1079, %v2131, 0.0
      %2174 = vadd.xlane.f32.xlu0 %v2173
      %v2175 = vpop.xlane.xlu0 %2174
      %v2176 = vsel %vm1079, %v2132, 0.0
      %2177 = vadd.xlane.f32.xlu0 %v2176
      %v2178 = vpop.xlane.xlu0 %2177
      %v2179 = vsel %vm1079, %v2133, 0.0
      %2180 = vadd.xlane.f32.xlu0 %v2179
      %v2181 = vpop.xlane.xlu0 %2180
      %v2182 = vsel %vm1079, %v2134, 0.0
      %2183 = vadd.xlane.f32.xlu0 %v2182
      %v2184 = vpop.xlane.xlu0 %2183
      %v2185 = vsel %vm1079, %v2135, 0.0
      %2186 = vadd.xlane.f32.xlu0 %v2185
      %v2187 = vpop.xlane.xlu0 %2186
      %v2188 = vsel %vm1079, %v2136, 0.0
      %2189 = vadd.xlane.f32.xlu0 %v2188
      %v2190 = vpop.xlane.xlu0 %2189
      %v2191 = vsel %vm1079, %v2137, 0.0
      %2192 = vadd.xlane.f32.xlu0 %v2191
      %v2193 = vpop.xlane.xlu0 %2192
      %v2194 = vsel %vm1079, %v2138, 0.0
      %2195 = vadd.xlane.f32.xlu0 %v2194
      %v2196 = vpop.xlane.xlu0 %2195
      %v2197 = vsel %vm1079, %v2139, 0.0
      %2198 = vadd.xlane.f32.xlu0 %v2197
      %v2199 = vpop.xlane.xlu0 %2198
      %v2200 = vsel %vm1079, %v2140, 0.0
      %2201 = vadd.xlane.f32.xlu0 %v2200
      %v2202 = vpop.xlane.xlu0 %2201
      %v2203 = vsel %vm1079, %v2141, 0.0
      %2204 = vadd.xlane.f32.xlu0 %v2203
      %v2205 = vpop.xlane.xlu0 %2204
      %v2206 = vmul.f32 %v2142, %v2160
      %v2207 = vmul.f32 %v2143, %v2163
      %v2208 = vmul.f32 %v2144, %v2166
      %v2209 = vmul.f32 %v2145, %v2169
      %v2210 = vmul.f32 %v2146, %v2172
      %v2211 = vmul.f32 %v2147, %v2175
      %v2212 = vmul.f32 %v2148, %v2178
      %v2213 = vmul.f32 %v2149, %v2181
      %v2214 = vmul.f32 %v2150, %v2184
      %v2215 = vmul.f32 %v2151, %v2187
      %v2216 = vmul.f32 %v2152, %v2190
      %v2217 = vmul.f32 %v2153, %v2193
      %v2218 = vmul.f32 %v2154, %v2196
      %v2219 = vmul.f32 %v2155, %v2199
      %v2220 = vmul.f32 %v2156, %v2202
      %v2221 = vmul.f32 %v2157, %v2205
      %vm2222 = vcmask 7168
      %v2223 = vsel %vm2222, %v2206, 0.0
      %v2224 = vsel %vm2222, %v2207, 0.0
      %v2225 = vadd.f32 %v2223, %v2224
      %v2226 = vsel %vm2222, %v2208, 0.0
      %v2227 = vadd.f32 %v2225, %v2226
      %v2228 = vsel %vm2222, %v2209, 0.0
      %v2229 = vadd.f32 %v2227, %v2228
      %v2230 = vsel %vm2222, %v2210, 0.0
      %v2231 = vadd.f32 %v2229, %v2230
      %v2232 = vsel %vm2222, %v2211, 0.0
      %v2233 = vadd.f32 %v2231, %v2232
      %v2234 = vsel %vm2222, %v2212, 0.0
      %v2235 = vadd.f32 %v2233, %v2234
      %v2236 = vsel %vm2222, %v2213, 0.0
      %v2237 = vadd.f32 %v2235, %v2236
      %v2238 = vsel %vm2222, %v2214, 0.0
      %v2239 = vadd.f32 %v2237, %v2238
      %v2240 = vsel %vm2222, %v2215, 0.0
      %v2241 = vadd.f32 %v2239, %v2240
      %v2242 = vsel %vm2222, %v2216, 0.0
      %v2243 = vadd.f32 %v2241, %v2242
      %v2244 = vsel %vm2222, %v2217, 0.0
      %v2245 = vadd.f32 %v2243, %v2244
      %v2246 = vsel %vm2222, %v2218, 0.0
      %v2247 = vadd.f32 %v2245, %v2246
      %v2248 = vsel %vm2222, %v2219, 0.0
      %v2249 = vadd.f32 %v2247, %v2248
      %v2250 = vsel %vm2222, %v2220, 0.0
      %v2251 = vadd.f32 %v2249, %v2250
      %v2252 = vsel %vm2222, %v2221, 0.0
      %v2253 = vadd.f32 %v2251, %v2252
      %2254 = vadd.xlane.f32.xlu0 %v2253
      %v2255 = vpop.xlane.xlu0 %2254
      %v2256 = vrot.slane %v2255, 4
      %v2257 = vadd.f32 %v2255, %v2256
      %v2258 = vrot.slane %v2257, 2
      %v2259 = vadd.f32 %v2257, %v2258
      %v2260 = vrot.slane %v2259, 1
      %v2261 = vadd.f32 %v2259, %v2260
      %s2262 = vtos %v2261
      %v2263 = vstv %s2262
      %2264 = vst [vmem:[%s525] sm:$0x1] %v2263
      %2281 = vrot.lane.b32.xlu0 %v1225, 32
      %v2282 = vpop.permute.xlu0 %2281
      %2283 = vrot.lane.b32.xlu0 %v1227, 32
      %v2284 = vpop.permute.xlu0 %2283
      %2285 = vrot.lane.b32.xlu0 %v1229, 32
      %v2286 = vpop.permute.xlu0 %2285
      %2287 = vrot.lane.b32.xlu0 %v1231, 32
      %v2288 = vpop.permute.xlu0 %2287
      %2289 = vrot.lane.b32.xlu0 %v1233, 32
      %v2290 = vpop.permute.xlu0 %2289
      %2291 = vrot.lane.b32.xlu0 %v1235, 32
      %v2292 = vpop.permute.xlu0 %2291
      %2293 = vrot.lane.b32.xlu0 %v1237, 32
      %v2294 = vpop.permute.xlu0 %2293
      %2295 = vrot.lane.b32.xlu0 %v1239, 32
      %v2296 = vpop.permute.xlu0 %2295
      %2297 = vrot.lane.b32.xlu0 %v1241, 32
      %v2298 = vpop.permute.xlu0 %2297
      %2299 = vrot.lane.b32.xlu0 %v1243, 32
      %v2300 = vpop.permute.xlu0 %2299
      %2301 = vrot.lane.b32.xlu0 %v1245, 32
      %v2302 = vpop.permute.xlu0 %2301
      %2303 = vrot.lane.b32.xlu0 %v1247, 32
      %v2304 = vpop.permute.xlu0 %2303
      %2305 = vrot.lane.b32.xlu0 %v1249, 32
      %v2306 = vpop.permute.xlu0 %2305
      %2307 = vrot.lane.b32.xlu0 %v1251, 32
      %v2308 = vpop.permute.xlu0 %2307
      %2309 = vrot.lane.b32.xlu0 %v1253, 32
      %v2310 = vpop.permute.xlu0 %2309
      %2311 = vrot.lane.b32.xlu0 %v1255, 32
      %v2312 = vpop.permute.xlu0 %2311
      %v2329 = vsel %vm1079, %v1872, %v2282
      %v2330 = vsel %vm1079, %v1875, %v2284
      %v2331 = vsel %vm1079, %v1880, %v2286
      %v2332 = vsel %vm1079, %v1883, %v2288
      %v2333 = vsel %vm1079, %v1888, %v2290
      %v2334 = vsel %vm1079, %v1891, %v2292
      %v2335 = vsel %vm1079, %v1896, %v2294
      %v2336 = vsel %vm1079, %v1899, %v2296
      %v2337 = vsel %vm1079, %v1904, %v2298
      %v2338 = vsel %vm1079, %v1907, %v2300
      %v2339 = vsel %vm1079, %v1912, %v2302
      %v2340 = vsel %vm1079, %v1915, %v2304
      %v2341 = vsel %vm1079, %v1920, %v2306
      %v2342 = vsel %vm1079, %v1923, %v2308
      %v2343 = vsel %vm1079, %v1928, %v2310
      %v2344 = vsel %vm1079, %v1931, %v2312
      %vm2345 = vcmask 523264
      %2346 = vst.msk [vmem:[%s521] sm:$0xff] %vm2345, %v2329
      %2347 = vst.msk [vmem:[%s521 + $0x8] sm:$0xff] %vm2345, %v2330
      %2348 = vst.msk [vmem:[%s521 + $0x10] sm:$0xff] %vm2345, %v2331
      %2349 = vst.msk [vmem:[%s521 + $0x18] sm:$0xff] %vm2345, %v2332
      %2350 = vst.msk [vmem:[%s521 + $0x20] sm:$0xff] %vm2345, %v2333
      %2351 = vst.msk [vmem:[%s521 + $0x28] sm:$0xff] %vm2345, %v2334
      %2352 = vst.msk [vmem:[%s521 + $0x30] sm:$0xff] %vm2345, %v2335
      %2353 = vst.msk [vmem:[%s521 + $0x38] sm:$0xff] %vm2345, %v2336
      %2354 = vst.msk [vmem:[%s521 + $0x40] sm:$0xff] %vm2345, %v2337
      %2355 = vst.msk [vmem:[%s521 + $0x48] sm:$0xff] %vm2345, %v2338
      %2356 = vst.msk [vmem:[%s521 + $0x50] sm:$0xff] %vm2345, %v2339
      %2357 = vst.msk [vmem:[%s521 + $0x58] sm:$0xff] %vm2345, %v2340
      %2358 = vst.msk [vmem:[%s521 + $0x60] sm:$0xff] %vm2345, %v2341
      %2359 = vst.msk [vmem:[%s521 + $0x68] sm:$0xff] %vm2345, %v2342
      %2360 = vst.msk [vmem:[%s521 + $0x70] sm:$0xff] %vm2345, %v2343
      %2361 = vst.msk [vmem:[%s521 + $0x78] sm:$0xff] %vm2345, %v2344
      %v2362 = vsel %vm1812, %v1757, 0.0
      %v2363 = vrot.slane %v2362, 4
      %v2364 = vadd.f32 %v2362, %v2363
      %v2365 = vrot.slane %v2364, 2
      %v2366 = vadd.f32 %v2364, %v2365
      %v2367 = vrot.slane %v2366, 1
      %v2368 = vadd.f32 %v2366, %v2367
      %v2369 = vsel %vm1812, %v1758, 0.0
      %v2370 = vrot.slane %v2369, 4
      %v2371 = vadd.f32 %v2369, %v2370
      %v2372 = vrot.slane %v2371, 2
      %v2373 = vadd.f32 %v2371, %v2372
      %v2374 = vrot.slane %v2373, 1
      %v2375 = vadd.f32 %v2373, %v2374
      %v2376 = vsel %vm1812, %v1759, 0.0
      %v2377 = vrot.slane %v2376, 4
      %v2378 = vadd.f32 %v2376, %v2377
      %v2379 = vrot.slane %v2378, 2
      %v2380 = vadd.f32 %v2378, %v2379
      %v2381 = vrot.slane %v2380, 1
      %v2382 = vadd.f32 %v2380, %v2381
      %v2383 = vsel %vm1812, %v1760, 0.0
      %v2384 = vrot.slane %v2383, 4
      %v2385 = vadd.f32 %v2383, %v2384
      %v2386 = vrot.slane %v2385, 2
      %v2387 = vadd.f32 %v2385, %v2386
      %v2388 = vrot.slane %v2387, 1
      %v2389 = vadd.f32 %v2387, %v2388
      %v2390 = vsel %vm1812, %v1761, 0.0
      %v2391 = vrot.slane %v2390, 4
      %v2392 = vadd.f32 %v2390, %v2391
      %v2393 = vrot.slane %v2392, 2
      %v2394 = vadd.f32 %v2392, %v2393
      %v2395 = vrot.slane %v2394, 1
      %v2396 = vadd.f32 %v2394, %v2395
      %v2397 = vsel %vm1812, %v1762, 0.0
      %v2398 = vrot.slane %v2397, 4
      %v2399 = vadd.f32 %v2397, %v2398
      %v2400 = vrot.slane %v2399, 2
      %v2401 = vadd.f32 %v2399, %v2400
      %v2402 = vrot.slane %v2401, 1
      %v2403 = vadd.f32 %v2401, %v2402
      %v2404 = vsel %vm1812, %v1763, 0.0
      %v2405 = vrot.slane %v2404, 4
      %v2406 = vadd.f32 %v2404, %v2405
      %v2407 = vrot.slane %v2406, 2
      %v2408 = vadd.f32 %v2406, %v2407
      %v2409 = vrot.slane %v2408, 1
      %v2410 = vadd.f32 %v2408, %v2409
      %v2411 = vsel %vm1812, %v1764, 0.0
      %v2412 = vrot.slane %v2411, 4
      %v2413 = vadd.f32 %v2411, %v2412
      %v2414 = vrot.slane %v2413, 2
      %v2415 = vadd.f32 %v2413, %v2414
      %v2416 = vrot.slane %v2415, 1
      %v2417 = vadd.f32 %v2415, %v2416
      %v2418 = vsel %vm1812, %v1765, 0.0
      %v2419 = vrot.slane %v2418, 4
      %v2420 = vadd.f32 %v2418, %v2419
      %v2421 = vrot.slane %v2420, 2
      %v2422 = vadd.f32 %v2420, %v2421
      %v2423 = vrot.slane %v2422, 1
      %v2424 = vadd.f32 %v2422, %v2423
      %v2425 = vsel %vm1812, %v1766, 0.0
      %v2426 = vrot.slane %v2425, 4
      %v2427 = vadd.f32 %v2425, %v2426
      %v2428 = vrot.slane %v2427, 2
      %v2429 = vadd.f32 %v2427, %v2428
      %v2430 = vrot.slane %v2429, 1
      %v2431 = vadd.f32 %v2429, %v2430
      %v2432 = vsel %vm1812, %v1767, 0.0
      %v2433 = vrot.slane %v2432, 4
      %v2434 = vadd.f32 %v2432, %v2433
      %v2435 = vrot.slane %v2434, 2
      %v2436 = vadd.f32 %v2434, %v2435
      %v2437 = vrot.slane %v2436, 1
      %v2438 = vadd.f32 %v2436, %v2437
      %v2439 = vsel %vm1812, %v1768, 0.0
      %v2440 = vrot.slane %v2439, 4
      %v2441 = vadd.f32 %v2439, %v2440
      %v2442 = vrot.slane %v2441, 2
      %v2443 = vadd.f32 %v2441, %v2442
      %v2444 = vrot.slane %v2443, 1
      %v2445 = vadd.f32 %v2443, %v2444
      %v2446 = vsel %vm1812, %v1769, 0.0
      %v2447 = vrot.slane %v2446, 4
      %v2448 = vadd.f32 %v2446, %v2447
      %v2449 = vrot.slane %v2448, 2
      %v2450 = vadd.f32 %v2448, %v2449
      %v2451 = vrot.slane %v2450, 1
      %v2452 = vadd.f32 %v2450, %v2451
      %v2453 = vsel %vm1812, %v1770, 0.0
      %v2454 = vrot.slane %v2453, 4
      %v2455 = vadd.f32 %v2453, %v2454
      %v2456 = vrot.slane %v2455, 2
      %v2457 = vadd.f32 %v2455, %v2456
      %v2458 = vrot.slane %v2457, 1
      %v2459 = vadd.f32 %v2457, %v2458
      %v2460 = vsel %vm1812, %v1771, 0.0
      %v2461 = vrot.slane %v2460, 4
      %v2462 = vadd.f32 %v2460, %v2461
      %v2463 = vrot.slane %v2462, 2
      %v2464 = vadd.f32 %v2462, %v2463
      %v2465 = vrot.slane %v2464, 1
      %v2466 = vadd.f32 %v2464, %v2465
      %v2467 = vsel %vm1812, %v1772, 0.0
      %v2468 = vrot.slane %v2467, 4
      %v2469 = vadd.f32 %v2467, %v2468
      %v2470 = vrot.slane %v2469, 2
      %v2471 = vadd.f32 %v2469, %v2470
      %v2472 = vrot.slane %v2471, 1
      %v2473 = vadd.f32 %v2471, %v2472
      %v2474 = vmul.f32 %v2368, 0.125
      %v2475 = vmul.f32 %v2375, 0.125
      %v2476 = vmul.f32 %v2382, 0.125
      %v2477 = vmul.f32 %v2389, 0.125
      %v2478 = vmul.f32 %v2396, 0.125
      %v2479 = vmul.f32 %v2403, 0.125
      %v2480 = vmul.f32 %v2410, 0.125
      %v2481 = vmul.f32 %v2417, 0.125
      %v2482 = vmul.f32 %v2424, 0.125
      %v2483 = vmul.f32 %v2431, 0.125
      %v2484 = vmul.f32 %v2438, 0.125
      %v2485 = vmul.f32 %v2445, 0.125
      %v2486 = vmul.f32 %v2452, 0.125
      %v2487 = vmul.f32 %v2459, 0.125
      %v2488 = vmul.f32 %v2466, 0.125
      %v2489 = vmul.f32 %v2473, 0.125
      %v2490 = vpack.c.bf16 %v2474, %v2474
      %v2491 = vpack.c.bf16 %v2475, %v2475
      %v2492 = vpack.c.bf16 %v2476, %v2476
      %v2493 = vpack.c.bf16 %v2477, %v2477
      %v2494 = vpack.c.bf16 %v2478, %v2478
      %v2495 = vpack.c.bf16 %v2479, %v2479
      %v2496 = vpack.c.bf16 %v2480, %v2480
      %v2497 = vpack.c.bf16 %v2481, %v2481
      %v2498 = vpack.c.bf16 %v2482, %v2482
      %v2499 = vpack.c.bf16 %v2483, %v2483
      %v2500 = vpack.c.bf16 %v2484, %v2484
      %v2501 = vpack.c.bf16 %v2485, %v2485
      %v2502 = vpack.c.bf16 %v2486, %v2486
      %v2503 = vpack.c.bf16 %v2487, %v2487
      %v2504 = vpack.c.bf16 %v2488, %v2488
      %v2505 = vpack.c.bf16 %v2489, %v2489
      %v2506 = vld [vmem:[%s9] sm:$0xf]
      %v2507 = vld [vmem:[%s9 + $0x4] sm:$0xf]
      %v2508 = vld [vmem:[%s9 + $0x8] sm:$0xf]
      %v2509 = vld [vmem:[%s9 + $0xc] sm:$0xf]
      %v2510 = vld [vmem:[%s9 + $0x10] sm:$0xf]
      %v2511 = vld [vmem:[%s9 + $0x14] sm:$0xf]
      %v2512 = vld [vmem:[%s10] sm:$0x1]
      %v2514 = vlaneseq
      %v2515 = vshrl.u32 %v2514, 7
      %v2516 = vsub.s32 0, %v2515
      %v2517 = vrot.slane %v2512, %v2516
      %v2535 = vunpack.c.l.b16 %v2490
      %v2536 = vunpack.c.l.b16 %v2491
      %v2537 = vunpack.c.l.b16 %v2492
      %v2538 = vunpack.c.l.b16 %v2493
      %v2539 = vunpack.c.l.b16 %v2494
      %v2540 = vunpack.c.l.b16 %v2495
      %v2541 = vunpack.c.l.b16 %v2496
      %v2542 = vunpack.c.l.b16 %v2497
      %v2543 = vunpack.c.l.b16 %v2498
      %v2544 = vunpack.c.l.b16 %v2499
      %v2545 = vunpack.c.l.b16 %v2500
      %v2546 = vunpack.c.l.b16 %v2501
      %v2547 = vunpack.c.l.b16 %v2502
      %v2548 = vunpack.c.l.b16 %v2503
      %v2549 = vunpack.c.l.b16 %v2504
      %v2550 = vunpack.c.l.b16 %v2505
      %vm2551 = vcmask 1041409
      %v2552 = vsel %vm2551, %v2536, %v2535
      %vm2553 = vcmask 1042434
      %v2554 = vsel %vm2553, %v2537, %v2552
      %vm2555 = vcmask 1043459
      %v2556 = vsel %vm2555, %v2538, %v2554
      %vm2557 = vcmask 1044484
      %v2558 = vsel %vm2557, %v2539, %v2556
      %vm2559 = vcmask 1045509
      %v2560 = vsel %vm2559, %v2540, %v2558
      %vm2561 = vcmask 1046534
      %v2562 = vsel %vm2561, %v2541, %v2560
      %vm2563 = vcmask 1047559
      %v2564 = vsel %vm2563, %v2542, %v2562
      %v2565 = vsel %vm2551, %v2544, %v2543
      %v2566 = vsel %vm2553, %v2545, %v2565
      %v2567 = vsel %vm2555, %v2546, %v2566
      %v2568 = vsel %vm2557, %v2547, %v2567
      %v2569 = vsel %vm2559, %v2548, %v2568
      %v2570 = vsel %vm2561, %v2549, %v2569
      %v2571 = vsel %vm2563, %v2550, %v2570
      %v2572 = vpack.c.b16 %v2571, %v2564
      %v2579 = vunpack.c.l.b16 %v2506
      %v2580 = vunpack.c.l.b16 %v2507
      %v2581 = vunpack.c.l.b16 %v2508
      %v2582 = vunpack.c.l.b16 %v2509
      %v2583 = vunpack.c.l.b16 %v2510
      %v2584 = vunpack.c.l.b16 %v2511
      %v2585 = vpack.c.b16 %v2580, %v2579
      %v2586 = vpack.c.b16 %v2582, %v2581
      %v2587 = vpack.c.b16 %v2584, %v2583
      %v2592 = vsel %vm1812, %v2572, 0
      %2594 = vmatprep.subr.bf16.mxu0 0
      %2595 = vmatpush1.bf16.msra.mxu0 0
      %2596 = vmatprep.subr.bf16.mxu0 0
      %2597 = vmatpush1.bf16.msra.mxu0 0
      %2598 = vmatprep.subr.bf16.mxu0 0
      %2599 = vmatpush1.bf16.msra.mxu0 0
      %2600 = vmatprep.subr.bf16.mxu0 0
      %2601 = vmatpush1.bf16.msra.mxu0 0
      %2602 = vmatprep.subr.bf16.mxu0 0
      %2603 = vmatpush1.bf16.msra.mxu0 0
      %2604 = vmatprep.subr.bf16.mxu0 0
      %2605 = vmatpush1.bf16.msra.mxu0 %v2587
      %2606 = vmatprep.subr.bf16.mxu0 0
      %2607 = vmatpush1.bf16.msra.mxu0 %v2586
      %2608 = vmatprep.subr.bf16.mxu0 0
      %2609 = vmatpush1.bf16.msra.mxu0 %v2585
      %2610 = vmatprep.subr.bf16.mxu0 0
      %2611 = vmatpush2.bf16.msra.mxu0 0
      %2612 = vmatprep.subr.bf16.mxu0 0
      %2613 = vmatpush2.bf16.msra.mxu0 0
      %2614 = vmatprep.subr.bf16.mxu0 0
      %2615 = vmatpush2.bf16.msra.mxu0 0
      %2616 = vmatprep.subr.bf16.mxu0 0
      %2617 = vmatpush2.bf16.msra.mxu0 0
      %2618 = vmatprep.subr.bf16.mxu0 0
      %2619 = vmatpush2.bf16.msra.mxu0 0
      %2620 = vmatprep.subr.bf16.mxu0 0
      %2621 = vmatpush2.bf16.msra.mxu0 0
      %2622 = vmatprep.subr.bf16.mxu0 0
      %2623 = vmatpush2.bf16.msra.mxu0 0
      %2624 = vmatprep.subr.bf16.mxu0 0
      %2625 = vmatpush2.bf16.msra.mxu0 0
      %2626 = vmatprep.mubr.bf16.mxu0 0
      %2627 = vmatmul.mubr.bf16.gmra.mxu0 %v2592
      %v2628 = vpop.f32.mrf.mxu0
      %v2629 = vadd.f32 %v2517, %v2628
      %v2630 = vpop.f32.mrf.mxu0
      %v2631 = vpop.f32.mrf.mxu0
      %v2632 = vadd.f32 %v2517, %v2631
      %v2633 = vpop.f32.mrf.mxu0
      %2634 = vdwg.mxu0
      %vm2635 = vcmask 64512
      %2636 = vst.msk [vmem:[%s530] sm:$0xff] %vm2635, %v2629
      %2637 = vst.msk [vmem:[%s530 + $0x8] sm:$0xff] %vm2635, %v2632
      %s2638 = smul.u32 16, %s25
      %p2639 = scmp.lt.s32.totalorder %s2638, 31
      %s2640 = scalar_select %p2639, %s2638, 31
      %s2641 = smul.addr %s2640, 8
      %s2642 = scalar_lea.vmem %s11, %s2641
      %p2643 = scmp.lt.s32.totalorder %s25, 1
      %s2644 = scalar_select %p2643, %s25, 1
      %s2645 = scalar_lea.vmem %s12, %s2644
      %s2646 = smul.u32 2, %s25
      %p2647 = scmp.lt.s32.totalorder %s2646, 3
      %s2648 = scalar_select %p2647, %s2646, 3
      %s2649 = smul.addr %s2648, 8
      %s2650 = scalar_lea.vmem %s13, %s2649
      // Predicated region
      $region65: #{bfn_forward.1} parent=63 // pred_check
        %p2651 = pneg %p294
      $region66: #{bfn_forward.1} parent=63 // pred_check_branch
        %2653 = sbr.rel (%p2651) target = $region68
      $region67: #{bfn_forward.1} parent=63 // pred_region
        %s2654 = smul.u32 16, %s25
      $region68: #{bfn_forward.1} parent=63 // pred_fallthru
        _
      // Predicated region
      $region69: #{bfn_forward.1} parent=63 // pred_check
        %p2655 = pneg %p320
      $region70: #{bfn_forward.1} parent=63 // pred_check_branch
        %2657 = sbr.rel (%p2655) target = $region72
      $region71: #{bfn_forward.1} parent=63 // pred_region
        _
      $region72: #{bfn_forward.1} parent=63 // pred_fallthru
        _
      // Predicated region
      $region73: #{bfn_forward.1} parent=63 // pred_check
        %p2658 = pneg %p346
      $region74: #{bfn_forward.1} parent=63 // pred_check_branch
        %2660 = sbr.rel (%p2658) target = $region76
      $region75: #{bfn_forward.1} parent=63 // pred_region
        %s2661 = smul.u32 2, %s25
      $region76: #{bfn_forward.1} parent=63 // pred_fallthru
        _
    $region64: #{bfn_forward.1} parent=5 // pred_fallthru
      _
    %p2662 = scmp.le.s32.totalorder 2, %s20
    // Predicated region
    $region77: #{bfn_forward.1} parent=5 // pred_check
      %p2663 = pneg %p2662
    $region78: #{bfn_forward.1} parent=5 // pred_check_branch
      %2665 = sbr.rel (%p2663) target = $region80
    $region79: #{bfn_forward.1} parent=5 // pred_region
      %s2666 = ssub.s32 %s20, 2
      // Predicated region
      $region81: #{bfn_forward.1} parent=79 // pred_check
        %p2667 = pneg %p300
      $region82: #{bfn_forward.1} parent=79 // pred_check_branch
        %2669 = sbr.rel (%p2667) target = $region84
      $region83: #{bfn_forward.1} parent=79 // pred_region
        %s2670 = smul.u32 16, %s26
        %p2671 = scmp.lt.s32.totalorder %s2670, 31
        %s2672 = scalar_select %p2671, %s2670, 31
        %s2673 = smul.addr %s2672, 8
        %s2674 = scalar_lea.vmem %s11, %s2673
      $region84: #{bfn_forward.1} parent=79 // pred_fallthru
        _
      // Predicated region
      $region85: #{bfn_forward.1} parent=79 // pred_check
        %p2675 = pneg %p326
      $region86: #{bfn_forward.1} parent=79 // pred_check_branch
        %2677 = sbr.rel (%p2675) target = $region88
      $region87: #{bfn_forward.1} parent=79 // pred_region
        %p2678 = scmp.lt.s32.totalorder %s26, 1
        %s2679 = scalar_select %p2678, %s26, 1
        %s2680 = scalar_lea.vmem %s12, %s2679
      $region88: #{bfn_forward.1} parent=79 // pred_fallthru
        _
      // Predicated region
      $region89: #{bfn_forward.1} parent=79 // pred_check
        %p2681 = pneg %p352
      $region90: #{bfn_forward.1} parent=79 // pred_check_branch
        %2683 = sbr.rel (%p2681) target = $region92
      $region91: #{bfn_forward.1} parent=79 // pred_region
        %s2684 = smul.u32 2, %s26
        %p2685 = scmp.lt.s32.totalorder %s2684, 3
        %s2686 = scalar_select %p2685, %s2684, 3
        %s2687 = smul.addr %s2686, 8
        %s2688 = scalar_lea.vmem %s13, %s2687
      $region92: #{bfn_forward.1} parent=79 // pred_fallthru
        _
    $region80: #{bfn_forward.1} parent=5 // pred_fallthru
      _
  $region6: #{bfn_forward.1} parent=0 // loop_footer
    %s24 = sadd.s32 1, %s20
  $region7: #{bfn_forward.1} parent=0 // loop_footer_branch
    %19 = sbr.rel target = $region3
  $region8: #{bfn_forward.1} parent=0 // loop_exit
    _

</llo_original>
